<compile_context>
chip_gen: v7x
topology: tpu7x:2x2x1
jax: 0.10.0
libtpu: 0.0.40
codegen_flags: <defaults>
</compile_context>

<pallas_src>
import functools

import jax
import jax.numpy as jnp
from jax.experimental import pallas as pl
from jax.experimental.pallas import tpu as pltpu


def _gru_recurrence_kernel(g_ref, h0_ref, whf_ref, whh_ref,
                           out_ref, h_last_ref, h_sc, *, valid_t, mask_time):
    """One grid step = TT time steps of the minimal-GRU recurrence for one batch block.

    g_ref      : (TT, BB, 2*EOp)  precomputed  x_t @ [wxf|wxh] + [bf|bh]   (f32 or bf16)
    h0_ref     : (BB, EOp) f32    initial hidden state for this batch block
    whf_ref    : (EOp, EOp)       recurrent weights (f32 or bf16), VMEM-resident
    whh_ref    : (EOp, EOp)
    out_ref    : (TT, BB, EOp)    hidden states h_t, time-major layout
    h_last_ref : (BB, EOp) f32    exact final hidden state (resident across time)
    h_sc       : (BB, EOp) f32    hidden state carried across time blocks (scratch)
    """
    EOp = whf_ref.shape[0]
    TT = g_ref.shape[0]
    w_dtype = whf_ref.dtype

    # Load the initial hidden state at the first time block of each batch block.
    @pl.when(pl.program_id(1) == 0)
    def _():
        h_sc[...] = h0_ref[...].astype(jnp.float32)

    whf = whf_ref[...]
    whh = whh_ref[...]
    t_base = pl.program_id(1) * TT

    def step(s, h):
        g = g_ref[s].astype(jnp.float32)          # (BB, 2*EOp) dense vreg slab
        gf = g[:, :EOp]                           # x_t @ wxf + bf
        gh = g[:, EOp:]                           # x_t @ wxh + bh

        # ft = sigmoid(x_t @ wxf + h_{t-1} @ whf + bf)
        ft = jax.nn.sigmoid(
            gf + jnp.dot(h.astype(w_dtype), whf,
                         preferred_element_type=jnp.float32))
        # htp = tanh(x_t @ wxh + (h_{t-1} * ft) @ whh + bh)
        htp = jnp.tanh(
            gh + jnp.dot((h * ft).astype(w_dtype), whh,
                         preferred_element_type=jnp.float32))
        # h_t = (1 - ft) * h_{t-1} + ft * htp  ==  h + ft * (htp - h)
        h_new = h + ft * (htp - h)
        if mask_time:
            # Padded time steps (t >= T) must not advance the carry.
            h_new = jnp.where(t_base + s < valid_t, h_new, h)
        out_ref[s] = h_new.astype(out_ref.dtype)
        return h_new

    h = h_sc[...]
    if TT <= 8:
        for s in range(TT):                       # static, fully unrolled
            h = step(s, h)
    else:
        # Partial unroll keeps scheduler visibility without blowing vreg live ranges.
        h = jax.lax.fori_loop(0, TT, step, h, unroll=8)

    h_sc[...] = h                                 # carry to the next time block
    h_last_ref[...] = h                           # exact f32 final state (resident)


def _round_up(n, m):
    return ((n + m - 1) // m) * m


def _pick_batch_block(Bp, cap=256):
    """Largest multiple of 8 dividing Bp, <= cap; prefer >=2 blocks when Bp >= 16."""
    cands = [c for c in range(8, Bp + 1, 8) if Bp % c == 0]
    target = min(cap, Bp)
    if Bp >= 16:
        target = min(target, Bp // 2)   # give the 'parallel' axis >= 2 blocks (v7x 2 TCs)
    best = cands[0]
    for c in cands:
        if c <= target:
            best = c
    return best


def _vmem_block_bytes(BB, TT, EOp, gbytes, obytes, wbytes):
    """Working-set estimate for one grid step's buffers."""
    return (2 * TT * BB * 2 * EOp * gbytes   # gates block, double-buffered
            + 2 * TT * BB * EOp * obytes     # out block, double-buffered
            + 2 * EOp * EOp * wbytes         # whf + whh, single-buffered residents
            + BB * EOp * 4                   # h0 block, single-buffered
            + 2 * BB * EOp * 4               # h_last output
            + BB * EOp * 4)                  # h_sc scratch


def gru_minimal_forward(x, h0, wxf, whf, bf, wxh, whh, bh, *,
                        weight_dtype=jnp.bfloat16,
                        gate_dtype=jnp.bfloat16,
                        out_dtype=jnp.bfloat16,
                        time_block=16,
                        batch_block=None,
                        vmem_budget_bytes=48 * 1024 * 1024):
    """GRUMinimal forward (NOT_MUTATED all 1.0).

    x: (B, T, EI) batch_first, h0: (B, EO).
    Returns (outs (B, T, EO) in out_dtype, h_final (B, EO) exact f32 carry).
    """
    B, T, EI = x.shape
    EO = h0.shape[-1]
    f32 = jnp.float32

    # ---- hardware tiles: sublanes (8) on batch, lanes (128) on hidden ----
    Bp = _round_up(B, 8)
    EOp = _round_up(EO, 128)

    TT = max(1, min(time_block, T))
    if batch_block is None:
        BB = _pick_batch_block(Bp)
    else:
        BB = batch_block
        assert Bp % BB == 0 and BB % 8 == 0, \
            "batch_block must be a multiple of 8 dividing padded B"

    # ---- VMEM-aware tiling (v7x has only 64 MiB; v5e/v6e have 128 MiB) ----
    gb = jnp.dtype(gate_dtype).itemsize
    ob = jnp.dtype(out_dtype).itemsize
    wb = jnp.dtype(weight_dtype).itemsize
    while _vmem_block_bytes(BB, TT, EOp, gb, ob, wb) > vmem_budget_bytes and TT > 1:
        TT = max(1, TT // 2)
    if batch_block is None:
        cands = sorted(c for c in range(8, Bp + 1, 8) if Bp % c == 0)
        while _vmem_block_bytes(BB, TT, EOp, gb, ob, wb) > vmem_budget_bytes and BB > 8:
            smaller = [c for c in cands if c < BB]
            BB = smaller[-1] if smaller else 8
    est = _vmem_block_bytes(BB, TT, EOp, gb, ob, wb)
    vmem_limit = int(min(100 * 1024 * 1024,
                         max(32 * 1024 * 1024, est * 5 // 4 + 4 * 1024 * 1024)))

    Tp = _round_up(T, TT)

    # ---- pad parameters / inputs; zero padding is mathematically inert ----
    x_p = jnp.zeros((Bp, Tp, EI), f32).at[:B, :T, :].set(x.astype(f32))
    h0_p = jnp.zeros((Bp, EOp), f32).at[:B, :EO].set(h0.astype(f32))
    wxf_p = jnp.zeros((EI, EOp), f32).at[:, :EO].set(wxf.astype(f32))
    wxh_p = jnp.zeros((EI, EOp), f32).at[:, :EO].set(wxh.astype(f32))
    whf_p = jnp.zeros((EOp, EOp), weight_dtype).at[:EO, :EO].set(whf.astype(weight_dtype))
    whh_p = jnp.zeros((EOp, EOp), weight_dtype).at[:EO, :EO].set(whh.astype(weight_dtype))
    bf_p = jnp.zeros((EOp,), f32).at[:EO].set(bf.astype(f32))
    bh_p = jnp.zeros((EOp,), f32).at[:EO].set(bh.astype(f32))

    # ---- hoisted input projection: one big matmul over all (padded) time steps ----
    wx_cat = jnp.concatenate([wxf_p, wxh_p], axis=1).astype(weight_dtype)   # (EI, 2*EOp)
    b_cat = jnp.concatenate([bf_p, bh_p])                                   # (2*EOp,)
    x_tm = jnp.transpose(x_p, (1, 0, 2)).reshape(Tp * Bp, EI)               # time-major
    gates = (jnp.dot(x_tm.astype(weight_dtype), wx_cat,
                     preferred_element_type=jnp.float32) + b_cat)
    gates = gates.astype(gate_dtype).reshape(Tp, Bp, 2 * EOp)

    # ---- serial recurrence kernel ----
    grid = (Bp // BB, Tp // TT)

    def _resident_weight_spec():
        # Constant index_map -> single-buffer the resident weights (VMEM saver on v7x).
        return pl.BlockSpec((EOp, EOp), lambda b, t: (0, 0),
                            pipeline_mode=pl.Buffered(1))

    out_tm, h_last = pl.pallas_call(
        functools.partial(_gru_recurrence_kernel,
                          valid_t=T, mask_time=(Tp != T)),
        out_shape=(jax.ShapeDtypeStruct((Tp, Bp, EOp), out_dtype),
                   jax.ShapeDtypeStruct((Bp, EOp), jnp.float32)),
        grid_spec=pltpu.PrefetchScalarGridSpec(
            num_scalar_prefetch=0,
            grid=grid,
            in_specs=[
                # gates, time-major: per-step slice is a dense (BB, 2*EOp) slab
                pl.BlockSpec((TT, BB, 2 * EOp), lambda b, t: (t, b, 0)),
                # h0: constant in t -> single-buffered
                pl.BlockSpec((BB, EOp), lambda b, t: (b, 0),
                             pipeline_mode=pl.Buffered(1)),
                _resident_weight_spec(),                                   # whf
                _resident_weight_spec(),                                   # whh
            ],
            out_specs=[
                pl.BlockSpec((TT, BB, EOp), lambda b, t: (t, b, 0)),       # hidden states
                pl.BlockSpec((BB, EOp), lambda b, t: (b, 0)),              # exact final h
            ],
            scratch_shapes=[pltpu.VMEM((BB, EOp), jnp.float32)],
        ),
        compiler_params=pltpu.CompilerParams(
            # batch blocks are independent (v7x 2-TC split); time is a serial recurrence.
            dimension_semantics=("parallel", "arbitrary"),
            vmem_limit_bytes=vmem_limit,
        ),
    )(gates, h0_p, whf_p, whh_p)

    # one cheap XLA transpose back to batch_first
    outs = jnp.transpose(out_tm, (1, 0, 2))[:B, :T, :EO]
    h_final = h_last[:B, :EO]                     # exact f32 carry
    return outs, h_final


def _reference_forward(x, h0, wxf, whf, bf, wxh, whh, bh):
    """Pure-JAX reference mirroring the PyTorch loop (NOT_MUTATED all 1.0)."""
    def step(ht1, xt):
        ft = jax.nn.sigmoid(xt @ wxf + ht1 @ whf + bf[None, :])
        htp = jnp.tanh(xt @ wxh + (ht1 * ft) @ whh + bh[None, :])
        h = (1.0 - ft) * ht1 + ft * htp
        return h, h
    hN, outs_tm = jax.lax.scan(step, h0, jnp.transpose(x, (1, 0, 2)))
    return jnp.transpose(outs_tm, (1, 0, 2)), hN


def _run_case(B, T, EI, EO, seed, *, atol, rtol, **fwd_kwargs):
    key = jax.random.PRNGKey(seed)
    ks = jax.random.split(key, 8)
    # Parameter shapes per GRUMinimal.__init__:
    #   wxf, wxh: (EI, EO)  (Linear.weight.T), whf, whh: (EO, EO), bf, bh: (EO,)
    wxf = jax.random.normal(ks[0], (EI, EO), jnp.float32) * 0.1
    wxh = jax.random.normal(ks[1], (EI, EO), jnp.float32) * 0.1
    whf = jax.random.normal(ks[2], (EO, EO), jnp.float32) * 0.1
    whh = jax.random.normal(ks[3], (EO, EO), jnp.float32) * 0.1
    bf = jax.random.normal(ks[4], (EO,), jnp.float32) * 0.1
    bh = jax.random.normal(ks[5], (EO,), jnp.float32) * 0.1
    x = jax.random.normal(ks[6], (B, T, EI), jnp.float32)
    h0 = jax.random.normal(ks[7], (B, EO), jnp.float32)

    outs_ref, hN_ref = _reference_forward(x, h0, wxf, whf, bf, wxh, whh, bh)

    fwd = jax.jit(functools.partial(gru_minimal_forward, **fwd_kwargs))
    outs, hN = fwd(x, h0, wxf, whf, bf, wxh, whh, bh)
    jax.block_until_ready((outs, hN))

    assert outs.shape == (B, T, EO) and hN.shape == (B, EO)
    assert jnp.allclose(outs.astype(jnp.float32), outs_ref, atol=atol, rtol=rtol), "outs mismatch"
    assert jnp.allclose(hN.astype(jnp.float32), hN_ref, atol=atol, rtol=rtol), "h_final mismatch"


if __name__ == "__main__":
    f32 = jnp.float32
    bf16 = jnp.bfloat16

    # 1) Small shapes, exact f32 path (no padding on time, single blocks).
    _run_case(2, 8, 16, 32, seed=0, atol=1e-4, rtol=1e-4,
              weight_dtype=f32, gate_dtype=f32, out_dtype=f32)

    # 2) Same shapes, default fast path (bf16 weights / gates / outs, f32 carry).
    _run_case(2, 8, 16, 32, seed=0, atol=5e-2, rtol=5e-2,
              weight_dtype=bf16, gate_dtype=bf16, out_dtype=bf16)

    # 3) Exercise time padding (Tp > T) + fori_loop time loop + lane/sublane padding,
    #    exact f32 path.
    _run_case(4, 20, 48, 160, seed=1, atol=2e-4, rtol=2e-4,
              weight_dtype=f32, gate_dtype=f32, out_dtype=f32, time_block=16)

    print("KERNEL_OK")
</pallas_src>

<mosaic_0001>
module attributes {stable_mosaic.version = 11 : i64} {
  func.func @_gru_recurrence_kernel(%arg0: i32, %arg1: i32, %arg2: memref<8x8x256xf32, #tpu.memory_space<vmem>>, %arg3: memref<8x128xf32, #tpu.memory_space<vmem>>, %arg4: memref<128x128xf32, #tpu.memory_space<vmem>>, %arg5: memref<128x128xf32, #tpu.memory_space<vmem>>, %arg6: memref<8x8x128xf32, #tpu.memory_space<vmem>>, %arg7: memref<8x128xf32, #tpu.memory_space<vmem>>, %arg8: memref<8x128xf32, #tpu.memory_space<vmem>>) attributes {dimension_semantics = [#tpu.dimension_semantics<parallel>, #tpu.dimension_semantics<arbitrary>], iteration_bounds = array<i64: 1, 1>, scalar_prefetch = 0 : i64, scratch_operands = 1 : i64, tpu.core_type = #tpu.core_type<tc>, window_params = [{transform_indices = @transform_0, window_bounds = array<i64: 8, 8, 256>}, {pipeline_mode = #tpu.pipeline_mode<synchronous>, transform_indices = @transform_1, window_bounds = array<i64: 8, 128>}, {pipeline_mode = #tpu.pipeline_mode<synchronous>, transform_indices = @transform_2, window_bounds = array<i64: 128, 128>}, {pipeline_mode = #tpu.pipeline_mode<synchronous>, transform_indices = @transform_3, window_bounds = array<i64: 128, 128>}, {transform_indices = @transform_4, window_bounds = array<i64: 8, 8, 128>}, {transform_indices = @transform_5, window_bounds = array<i64: 8, 128>}]} {
    %c0_i32 = arith.constant 0 : i32
    %0 = arith.cmpi eq, %arg1, %c0_i32 : i32
    %1 = arith.extui %0 : i1 to i32
    %c0_i32_0 = arith.constant 0 : i32
    %2 = arith.cmpi ne, %1, %c0_i32_0 : i32
    scf.if %2 {
      %c0_74 = arith.constant 0 : index
      %c0_75 = arith.constant 0 : index
      %176 = vector.load %arg3[%c0_74, %c0_75] : memref<8x128xf32, #tpu.memory_space<vmem>>, vector<8x128xf32>
      %c0_76 = arith.constant 0 : index
      %c0_77 = arith.constant 0 : index
      %177 = vector.load %arg8[%c0_76, %c0_77] : memref<8x128xf32, #tpu.memory_space<vmem>>, vector<8x128xf32>
      tpu.vector_store %arg8[%c0_76, %c0_77], %176 {strides = array<i32>} : memref<8x128xf32, #tpu.memory_space<vmem>>, vector<8x128xf32>,
    } else {
    }
    %c0 = arith.constant 0 : index
    %c0_1 = arith.constant 0 : index
    %3 = vector.load %arg4[%c0, %c0_1] : memref<128x128xf32, #tpu.memory_space<vmem>>, vector<128x128xf32>
    %c0_2 = arith.constant 0 : index
    %c0_3 = arith.constant 0 : index
    %4 = vector.load %arg5[%c0_2, %c0_3] : memref<128x128xf32, #tpu.memory_space<vmem>>, vector<128x128xf32>
    %c0_4 = arith.constant 0 : index
    %c0_5 = arith.constant 0 : index
    %5 = vector.load %arg8[%c0_4, %c0_5] : memref<8x128xf32, #tpu.memory_space<vmem>>, vector<8x128xf32>
    %c0_6 = arith.constant 0 : index
    %c0_7 = arith.constant 0 : index
    %c0_8 = arith.constant 0 : index
    %6 = vector.load %arg2[%c0_6, %c0_7, %c0_8] : memref<8x8x256xf32, #tpu.memory_space<vmem>>, vector<1x8x256xf32>
    %7 = vector.shape_cast %6 : vector<1x8x256xf32> to vector<8x256xf32>
    %8 = vector.extract_strided_slice %7 {offsets = [0, 0], sizes = [8, 128], strides = [1, 1]} : vector<8x256xf32> to vector<8x128xf32>
    %9 = vector.extract_strided_slice %7 {offsets = [0, 128], sizes = [8, 128], strides = [1, 1]} : vector<8x256xf32> to vector<8x128xf32>
    %cst = arith.constant dense<0.000000e+00> : vector<8x128xf32>
    %10 = tpu.matmul %5, %3, %cst {dimension_numbers = #tpu.dot_dimension_numbers<[1], [0], [0], [1], [0, 0, 1, 1], [], []>} : vector<8x128xf32>, vector<128x128xf32>, vector<8x128xf32> -> vector<8x128xf32>
    %11 = arith.addf %8, %10 : vector<8x128xf32>
    %12 = arith.negf %11 : vector<8x128xf32>
    %13 = math.exp %12 : vector<8x128xf32>
    %cst_9 = arith.constant 1.000000e+00 : f32
    %14 = vector.broadcast %cst_9 : f32 to vector<8x128xf32>
    %15 = arith.addf %14, %13 : vector<8x128xf32>
    %16 = arith.divf %14, %15 : vector<8x128xf32>
    %17 = arith.mulf %5, %16 : vector<8x128xf32>
    %cst_10 = arith.constant dense<0.000000e+00> : vector<8x128xf32>
    %18 = tpu.matmul %17, %4, %cst_10 {dimension_numbers = #tpu.dot_dimension_numbers<[1], [0], [0], [1], [0, 0, 1, 1], [], []>} : vector<8x128xf32>, vector<128x128xf32>, vector<8x128xf32> -> vector<8x128xf32>
    %19 = arith.addf %9, %18 : vector<8x128xf32>
    %20 = math.tanh %19 : vector<8x128xf32>
    %21 = arith.subf %20, %5 : vector<8x128xf32>
    %22 = arith.mulf %16, %21 : vector<8x128xf32>
    %23 = arith.addf %5, %22 : vector<8x128xf32>
    %c0_11 = arith.constant 0 : index
    %c0_12 = arith.constant 0 : index
    %c0_13 = arith.constant 0 : index
    %24 = vector.load %arg6[%c0_11, %c0_12, %c0_13] : memref<8x8x128xf32, #tpu.memory_space<vmem>>, vector<1x8x128xf32>
    %25 = vector.shape_cast %24 : vector<1x8x128xf32> to vector<8x128xf32>
    %26 = vector.shape_cast %23 : vector<8x128xf32> to vector<1x8x128xf32>
    tpu.vector_store %arg6[%c0_11, %c0_12, %c0_13], %26 {strides = array<i32>} : memref<8x8x128xf32, #tpu.memory_space<vmem>>, vector<1x8x128xf32>,
    %c1 = arith.constant 1 : index
    %c0_14 = arith.constant 0 : index
    %c0_15 = arith.constant 0 : index
    %27 = vector.load %arg2[%c1, %c0_14, %c0_15] : memref<8x8x256xf32, #tpu.memory_space<vmem>>, vector<1x8x256xf32>
    %28 = vector.shape_cast %27 : vector<1x8x256xf32> to vector<8x256xf32>
    %29 = vector.extract_strided_slice %28 {offsets = [0, 0], sizes = [8, 128], strides = [1, 1]} : vector<8x256xf32> to vector<8x128xf32>
    %30 = vector.extract_strided_slice %28 {offsets = [0, 128], sizes = [8, 128], strides = [1, 1]} : vector<8x256xf32> to vector<8x128xf32>
    %cst_16 = arith.constant dense<0.000000e+00> : vector<8x128xf32>
    %31 = tpu.matmul %23, %3, %cst_16 {dimension_numbers = #tpu.dot_dimension_numbers<[1], [0], [0], [1], [0, 0, 1, 1], [], []>} : vector<8x128xf32>, vector<128x128xf32>, vector<8x128xf32> -> vector<8x128xf32>
    %32 = arith.addf %29, %31 : vector<8x128xf32>
    %33 = arith.negf %32 : vector<8x128xf32>
    %34 = math.exp %33 : vector<8x128xf32>
    %cst_17 = arith.constant 1.000000e+00 : f32
    %35 = vector.broadcast %cst_17 : f32 to vector<8x128xf32>
    %36 = arith.addf %35, %34 : vector<8x128xf32>
    %37 = arith.divf %35, %36 : vector<8x128xf32>
    %38 = arith.mulf %23, %37 : vector<8x128xf32>
    %cst_18 = arith.constant dense<0.000000e+00> : vector<8x128xf32>
    %39 = tpu.matmul %38, %4, %cst_18 {dimension_numbers = #tpu.dot_dimension_numbers<[1], [0], [0], [1], [0, 0, 1, 1], [], []>} : vector<8x128xf32>, vector<128x128xf32>, vector<8x128xf32> -> vector<8x128xf32>
    %40 = arith.addf %30, %39 : vector<8x128xf32>
    %41 = math.tanh %40 : vector<8x128xf32>
    %42 = arith.subf %41, %23 : vector<8x128xf32>
    %43 = arith.mulf %37, %42 : vector<8x128xf32>
    %44 = arith.addf %23, %43 : vector<8x128xf32>
    %c1_19 = arith.constant 1 : index
    %c0_20 = arith.constant 0 : index
    %c0_21 = arith.constant 0 : index
    %45 = vector.load %arg6[%c1_19, %c0_20, %c0_21] : memref<8x8x128xf32, #tpu.memory_space<vmem>>, vector<1x8x128xf32>
    %46 = vector.shape_cast %45 : vector<1x8x128xf32> to vector<8x128xf32>
    %47 = vector.shape_cast %44 : vector<8x128xf32> to vector<1x8x128xf32>
    tpu.vector_store %arg6[%c1_19, %c0_20, %c0_21], %47 {strides = array<i32>} : memref<8x8x128xf32, #tpu.memory_space<vmem>>, vector<1x8x128xf32>,
    %c2 = arith.constant 2 : index
    %c0_22 = arith.constant 0 : index
    %c0_23 = arith.constant 0 : index
    %48 = vector.load %arg2[%c2, %c0_22, %c0_23] : memref<8x8x256xf32, #tpu.memory_space<vmem>>, vector<1x8x256xf32>
    %49 = vector.shape_cast %48 : vector<1x8x256xf32> to vector<8x256xf32>
    %50 = vector.extract_strided_slice %49 {offsets = [0, 0], sizes = [8, 128], strides = [1, 1]} : vector<8x256xf32> to vector<8x128xf32>
    %51 = vector.extract_strided_slice %49 {offsets = [0, 128], sizes = [8, 128], strides = [1, 1]} : vector<8x256xf32> to vector<8x128xf32>
    %cst_24 = arith.constant dense<0.000000e+00> : vector<8x128xf32>
    %52 = tpu.matmul %44, %3, %cst_24 {dimension_numbers = #tpu.dot_dimension_numbers<[1], [0], [0], [1], [0, 0, 1, 1], [], []>} : vector<8x128xf32>, vector<128x128xf32>, vector<8x128xf32> -> vector<8x128xf32>
    %53 = arith.addf %50, %52 : vector<8x128xf32>
    %54 = arith.negf %53 : vector<8x128xf32>
    %55 = math.exp %54 : vector<8x128xf32>
    %cst_25 = arith.constant 1.000000e+00 : f32
    %56 = vector.broadcast %cst_25 : f32 to vector<8x128xf32>
    %57 = arith.addf %56, %55 : vector<8x128xf32>
    %58 = arith.divf %56, %57 : vector<8x128xf32>
    %59 = arith.mulf %44, %58 : vector<8x128xf32>
    %cst_26 = arith.constant dense<0.000000e+00> : vector<8x128xf32>
    %60 = tpu.matmul %59, %4, %cst_26 {dimension_numbers = #tpu.dot_dimension_numbers<[1], [0], [0], [1], [0, 0, 1, 1], [], []>} : vector<8x128xf32>, vector<128x128xf32>, vector<8x128xf32> -> vector<8x128xf32>
    %61 = arith.addf %51, %60 : vector<8x128xf32>
    %62 = math.tanh %61 : vector<8x128xf32>
    %63 = arith.subf %62, %44 : vector<8x128xf32>
    %64 = arith.mulf %58, %63 : vector<8x128xf32>
    %65 = arith.addf %44, %64 : vector<8x128xf32>
    %c2_27 = arith.constant 2 : index
    %c0_28 = arith.constant 0 : index
    %c0_29 = arith.constant 0 : index
    %66 = vector.load %arg6[%c2_27, %c0_28, %c0_29] : memref<8x8x128xf32, #tpu.memory_space<vmem>>, vector<1x8x128xf32>
    %67 = vector.shape_cast %66 : vector<1x8x128xf32> to vector<8x128xf32>
    %68 = vector.shape_cast %65 : vector<8x128xf32> to vector<1x8x128xf32>
    tpu.vector_store %arg6[%c2_27, %c0_28, %c0_29], %68 {strides = array<i32>} : memref<8x8x128xf32, #tpu.memory_space<vmem>>, vector<1x8x128xf32>,
    %c3 = arith.constant 3 : index
    %c0_30 = arith.constant 0 : index
    %c0_31 = arith.constant 0 : index
    %69 = vector.load %arg2[%c3, %c0_30, %c0_31] : memref<8x8x256xf32, #tpu.memory_space<vmem>>, vector<1x8x256xf32>
    %70 = vector.shape_cast %69 : vector<1x8x256xf32> to vector<8x256xf32>
    %71 = vector.extract_strided_slice %70 {offsets = [0, 0], sizes = [8, 128], strides = [1, 1]} : vector<8x256xf32> to vector<8x128xf32>
    %72 = vector.extract_strided_slice %70 {offsets = [0, 128], sizes = [8, 128], strides = [1, 1]} : vector<8x256xf32> to vector<8x128xf32>
    %cst_32 = arith.constant dense<0.000000e+00> : vector<8x128xf32>
    %73 = tpu.matmul %65, %3, %cst_32 {dimension_numbers = #tpu.dot_dimension_numbers<[1], [0], [0], [1], [0, 0, 1, 1], [], []>} : vector<8x128xf32>, vector<128x128xf32>, vector<8x128xf32> -> vector<8x128xf32>
    %74 = arith.addf %71, %73 : vector<8x128xf32>
    %75 = arith.negf %74 : vector<8x128xf32>
    %76 = math.exp %75 : vector<8x128xf32>
    %cst_33 = arith.constant 1.000000e+00 : f32
    %77 = vector.broadcast %cst_33 : f32 to vector<8x128xf32>
    %78 = arith.addf %77, %76 : vector<8x128xf32>
    %79 = arith.divf %77, %78 : vector<8x128xf32>
    %80 = arith.mulf %65, %79 : vector<8x128xf32>
    %cst_34 = arith.constant dense<0.000000e+00> : vector<8x128xf32>
    %81 = tpu.matmul %80, %4, %cst_34 {dimension_numbers = #tpu.dot_dimension_numbers<[1], [0], [0], [1], [0, 0, 1, 1], [], []>} : vector<8x128xf32>, vector<128x128xf32>, vector<8x128xf32> -> vector<8x128xf32>
    %82 = arith.addf %72, %81 : vector<8x128xf32>
    %83 = math.tanh %82 : vector<8x128xf32>
    %84 = arith.subf %83, %65 : vector<8x128xf32>
    %85 = arith.mulf %79, %84 : vector<8x128xf32>
    %86 = arith.addf %65, %85 : vector<8x128xf32>
    %c3_35 = arith.constant 3 : index
    %c0_36 = arith.constant 0 : index
    %c0_37 = arith.constant 0 : index
    %87 = vector.load %arg6[%c3_35, %c0_36, %c0_37] : memref<8x8x128xf32, #tpu.memory_space<vmem>>, vector<1x8x128xf32>
    %88 = vector.shape_cast %87 : vector<1x8x128xf32> to vector<8x128xf32>
    %89 = vector.shape_cast %86 : vector<8x128xf32> to vector<1x8x128xf32>
    tpu.vector_store %arg6[%c3_35, %c0_36, %c0_37], %89 {strides = array<i32>} : memref<8x8x128xf32, #tpu.memory_space<vmem>>, vector<1x8x128xf32>,
    %c4 = arith.constant 4 : index
    %c0_38 = arith.constant 0 : index
    %c0_39 = arith.constant 0 : index
    %90 = vector.load %arg2[%c4, %c0_38, %c0_39] : memref<8x8x256xf32, #tpu.memory_space<vmem>>, vector<1x8x256xf32>
    %91 = vector.shape_cast %90 : vector<1x8x256xf32> to vector<8x256xf32>
    %92 = vector.extract_strided_slice %91 {offsets = [0, 0], sizes = [8, 128], strides = [1, 1]} : vector<8x256xf32> to vector<8x128xf32>
    %93 = vector.extract_strided_slice %91 {offsets = [0, 128], sizes = [8, 128], strides = [1, 1]} : vector<8x256xf32> to vector<8x128xf32>
    %cst_40 = arith.constant dense<0.000000e+00> : vector<8x128xf32>
    %94 = tpu.matmul %86, %3, %cst_40 {dimension_numbers = #tpu.dot_dimension_numbers<[1], [0], [0], [1], [0, 0, 1, 1], [], []>} : vector<8x128xf32>, vector<128x128xf32>, vector<8x128xf32> -> vector<8x128xf32>
    %95 = arith.addf %92, %94 : vector<8x128xf32>
    %96 = arith.negf %95 : vector<8x128xf32>
    %97 = math.exp %96 : vector<8x128xf32>
    %cst_41 = arith.constant 1.000000e+00 : f32
    %98 = vector.broadcast %cst_41 : f32 to vector<8x128xf32>
    %99 = arith.addf %98, %97 : vector<8x128xf32>
    %100 = arith.divf %98, %99 : vector<8x128xf32>
    %101 = arith.mulf %86, %100 : vector<8x128xf32>
    %cst_42 = arith.constant dense<0.000000e+00> : vector<8x128xf32>
    %102 = tpu.matmul %101, %4, %cst_42 {dimension_numbers = #tpu.dot_dimension_numbers<[1], [0], [0], [1], [0, 0, 1, 1], [], []>} : vector<8x128xf32>, vector<128x128xf32>, vector<8x128xf32> -> vector<8x128xf32>
    %103 = arith.addf %93, %102 : vector<8x128xf32>
    %104 = math.tanh %103 : vector<8x128xf32>
    %105 = arith.subf %104, %86 : vector<8x128xf32>
    %106 = arith.mulf %100, %105 : vector<8x128xf32>
    %107 = arith.addf %86, %106 : vector<8x128xf32>
    %c4_43 = arith.constant 4 : index
    %c0_44 = arith.constant 0 : index
    %c0_45 = arith.constant 0 : index
    %108 = vector.load %arg6[%c4_43, %c0_44, %c0_45] : memref<8x8x128xf32, #tpu.memory_space<vmem>>, vector<1x8x128xf32>
    %109 = vector.shape_cast %108 : vector<1x8x128xf32> to vector<8x128xf32>
    %110 = vector.shape_cast %107 : vector<8x128xf32> to vector<1x8x128xf32>
    tpu.vector_store %arg6[%c4_43, %c0_44, %c0_45], %110 {strides = array<i32>} : memref<8x8x128xf32, #tpu.memory_space<vmem>>, vector<1x8x128xf32>,
    %c5 = arith.constant 5 : index
    %c0_46 = arith.constant 0 : index
    %c0_47 = arith.constant 0 : index
    %111 = vector.load %arg2[%c5, %c0_46, %c0_47] : memref<8x8x256xf32, #tpu.memory_space<vmem>>, vector<1x8x256xf32>
    %112 = vector.shape_cast %111 : vector<1x8x256xf32> to vector<8x256xf32>
    %113 = vector.extract_strided_slice %112 {offsets = [0, 0], sizes = [8, 128], strides = [1, 1]} : vector<8x256xf32> to vector<8x128xf32>
    %114 = vector.extract_strided_slice %112 {offsets = [0, 128], sizes = [8, 128], strides = [1, 1]} : vector<8x256xf32> to vector<8x128xf32>
    %cst_48 = arith.constant dense<0.000000e+00> : vector<8x128xf32>
    %115 = tpu.matmul %107, %3, %cst_48 {dimension_numbers = #tpu.dot_dimension_numbers<[1], [0], [0], [1], [0, 0, 1, 1], [], []>} : vector<8x128xf32>, vector<128x128xf32>, vector<8x128xf32> -> vector<8x128xf32>
    %116 = arith.addf %113, %115 : vector<8x128xf32>
    %117 = arith.negf %116 : vector<8x128xf32>
    %118 = math.exp %117 : vector<8x128xf32>
    %cst_49 = arith.constant 1.000000e+00 : f32
    %119 = vector.broadcast %cst_49 : f32 to vector<8x128xf32>
    %120 = arith.addf %119, %118 : vector<8x128xf32>
    %121 = arith.divf %119, %120 : vector<8x128xf32>
    %122 = arith.mulf %107, %121 : vector<8x128xf32>
    %cst_50 = arith.constant dense<0.000000e+00> : vector<8x128xf32>
    %123 = tpu.matmul %122, %4, %cst_50 {dimension_numbers = #tpu.dot_dimension_numbers<[1], [0], [0], [1], [0, 0, 1, 1], [], []>} : vector<8x128xf32>, vector<128x128xf32>, vector<8x128xf32> -> vector<8x128xf32>
    %124 = arith.addf %114, %123 : vector<8x128xf32>
    %125 = math.tanh %124 : vector<8x128xf32>
    %126 = arith.subf %125, %107 : vector<8x128xf32>
    %127 = arith.mulf %121, %126 : vector<8x128xf32>
    %128 = arith.addf %107, %127 : vector<8x128xf32>
    %c5_51 = arith.constant 5 : index
    %c0_52 = arith.constant 0 : index
    %c0_53 = arith.constant 0 : index
    %129 = vector.load %arg6[%c5_51, %c0_52, %c0_53] : memref<8x8x128xf32, #tpu.memory_space<vmem>>, vector<1x8x128xf32>
    %130 = vector.shape_cast %129 : vector<1x8x128xf32> to vector<8x128xf32>
    %131 = vector.shape_cast %128 : vector<8x128xf32> to vector<1x8x128xf32>
    tpu.vector_store %arg6[%c5_51, %c0_52, %c0_53], %131 {strides = array<i32>} : memref<8x8x128xf32, #tpu.memory_space<vmem>>, vector<1x8x128xf32>,
    %c6 = arith.constant 6 : index
    %c0_54 = arith.constant 0 : index
    %c0_55 = arith.constant 0 : index
    %132 = vector.load %arg2[%c6, %c0_54, %c0_55] : memref<8x8x256xf32, #tpu.memory_space<vmem>>, vector<1x8x256xf32>
    %133 = vector.shape_cast %132 : vector<1x8x256xf32> to vector<8x256xf32>
    %134 = vector.extract_strided_slice %133 {offsets = [0, 0], sizes = [8, 128], strides = [1, 1]} : vector<8x256xf32> to vector<8x128xf32>
    %135 = vector.extract_strided_slice %133 {offsets = [0, 128], sizes = [8, 128], strides = [1, 1]} : vector<8x256xf32> to vector<8x128xf32>
    %cst_56 = arith.constant dense<0.000000e+00> : vector<8x128xf32>
    %136 = tpu.matmul %128, %3, %cst_56 {dimension_numbers = #tpu.dot_dimension_numbers<[1], [0], [0], [1], [0, 0, 1, 1], [], []>} : vector<8x128xf32>, vector<128x128xf32>, vector<8x128xf32> -> vector<8x128xf32>
    %137 = arith.addf %134, %136 : vector<8x128xf32>
    %138 = arith.negf %137 : vector<8x128xf32>
    %139 = math.exp %138 : vector<8x128xf32>
    %cst_57 = arith.constant 1.000000e+00 : f32
    %140 = vector.broadcast %cst_57 : f32 to vector<8x128xf32>
    %141 = arith.addf %140, %139 : vector<8x128xf32>
    %142 = arith.divf %140, %141 : vector<8x128xf32>
    %143 = arith.mulf %128, %142 : vector<8x128xf32>
    %cst_58 = arith.constant dense<0.000000e+00> : vector<8x128xf32>
    %144 = tpu.matmul %143, %4, %cst_58 {dimension_numbers = #tpu.dot_dimension_numbers<[1], [0], [0], [1], [0, 0, 1, 1], [], []>} : vector<8x128xf32>, vector<128x128xf32>, vector<8x128xf32> -> vector<8x128xf32>
    %145 = arith.addf %135, %144 : vector<8x128xf32>
    %146 = math.tanh %145 : vector<8x128xf32>
    %147 = arith.subf %146, %128 : vector<8x128xf32>
    %148 = arith.mulf %142, %147 : vector<8x128xf32>
    %149 = arith.addf %128, %148 : vector<8x128xf32>
    %c6_59 = arith.constant 6 : index
    %c0_60 = arith.constant 0 : index
    %c0_61 = arith.constant 0 : index
    %150 = vector.load %arg6[%c6_59, %c0_60, %c0_61] : memref<8x8x128xf32, #tpu.memory_space<vmem>>, vector<1x8x128xf32>
    %151 = vector.shape_cast %150 : vector<1x8x128xf32> to vector<8x128xf32>
    %152 = vector.shape_cast %149 : vector<8x128xf32> to vector<1x8x128xf32>
    tpu.vector_store %arg6[%c6_59, %c0_60, %c0_61], %152 {strides = array<i32>} : memref<8x8x128xf32, #tpu.memory_space<vmem>>, vector<1x8x128xf32>,
    %c7 = arith.constant 7 : index
    %c0_62 = arith.constant 0 : index
    %c0_63 = arith.constant 0 : index
    %153 = vector.load %arg2[%c7, %c0_62, %c0_63] : memref<8x8x256xf32, #tpu.memory_space<vmem>>, vector<1x8x256xf32>
    %154 = vector.shape_cast %153 : vector<1x8x256xf32> to vector<8x256xf32>
    %155 = vector.extract_strided_slice %154 {offsets = [0, 0], sizes = [8, 128], strides = [1, 1]} : vector<8x256xf32> to vector<8x128xf32>
    %156 = vector.extract_strided_slice %154 {offsets = [0, 128], sizes = [8, 128], strides = [1, 1]} : vector<8x256xf32> to vector<8x128xf32>
    %cst_64 = arith.constant dense<0.000000e+00> : vector<8x128xf32>
    %157 = tpu.matmul %149, %3, %cst_64 {dimension_numbers = #tpu.dot_dimension_numbers<[1], [0], [0], [1], [0, 0, 1, 1], [], []>} : vector<8x128xf32>, vector<128x128xf32>, vector<8x128xf32> -> vector<8x128xf32>
    %158 = arith.addf %155, %157 : vector<8x128xf32>
    %159 = arith.negf %158 : vector<8x128xf32>
    %160 = math.exp %159 : vector<8x128xf32>
    %cst_65 = arith.constant 1.000000e+00 : f32
    %161 = vector.broadcast %cst_65 : f32 to vector<8x128xf32>
    %162 = arith.addf %161, %160 : vector<8x128xf32>
    %163 = arith.divf %161, %162 : vector<8x128xf32>
    %164 = arith.mulf %149, %163 : vector<8x128xf32>
    %cst_66 = arith.constant dense<0.000000e+00> : vector<8x128xf32>
    %165 = tpu.matmul %164, %4, %cst_66 {dimension_numbers = #tpu.dot_dimension_numbers<[1], [0], [0], [1], [0, 0, 1, 1], [], []>} : vector<8x128xf32>, vector<128x128xf32>, vector<8x128xf32> -> vector<8x128xf32>
    %166 = arith.addf %156, %165 : vector<8x128xf32>
    %167 = math.tanh %166 : vector<8x128xf32>
    %168 = arith.subf %167, %149 : vector<8x128xf32>
    %169 = arith.mulf %163, %168 : vector<8x128xf32>
    %170 = arith.addf %149, %169 : vector<8x128xf32>
    %c7_67 = arith.constant 7 : index
    %c0_68 = arith.constant 0 : index
    %c0_69 = arith.constant 0 : index
    %171 = vector.load %arg6[%c7_67, %c0_68, %c0_69] : memref<8x8x128xf32, #tpu.memory_space<vmem>>, vector<1x8x128xf32>
    %172 = vector.shape_cast %171 : vector<1x8x128xf32> to vector<8x128xf32>
    %173 = vector.shape_cast %170 : vector<8x128xf32> to vector<1x8x128xf32>
    tpu.vector_store %arg6[%c7_67, %c0_68, %c0_69], %173 {strides = array<i32>} : memref<8x8x128xf32, #tpu.memory_space<vmem>>, vector<1x8x128xf32>,
    %c0_70 = arith.constant 0 : index
    %c0_71 = arith.constant 0 : index
    %174 = vector.load %arg8[%c0_70, %c0_71] : memref<8x128xf32, #tpu.memory_space<vmem>>, vector<8x128xf32>
    tpu.vector_store %arg8[%c0_70, %c0_71], %170 {strides = array<i32>} : memref<8x128xf32, #tpu.memory_space<vmem>>, vector<8x128xf32>,
    %c0_72 = arith.constant 0 : index
    %c0_73 = arith.constant 0 : index
    %175 = vector.load %arg7[%c0_72, %c0_73] : memref<8x128xf32, #tpu.memory_space<vmem>>, vector<8x128xf32>
    tpu.vector_store %arg7[%c0_72, %c0_73], %170 {strides = array<i32>} : memref<8x128xf32, #tpu.memory_space<vmem>>, vector<8x128xf32>,
    return
  }
  func.func @transform_0(%arg0: i32, %arg1: i32) -> (i32, i32, i32) {
    %c0_i32 = arith.constant 0 : i32
    %c0_i32_0 = arith.constant 0 : i32
    return %arg1, %arg0, %c0_i32 : i32, i32, i32
  }
  func.func @transform_1(%arg0: i32, %arg1: i32) -> (i32, i32) {
    %c0_i32 = arith.constant 0 : i32
    %c0_i32_0 = arith.constant 0 : i32
    return %arg0, %c0_i32 : i32, i32
  }
  func.func @transform_2(%arg0: i32, %arg1: i32) -> (i32, i32) {
    %c0_i32 = arith.constant 0 : i32
    %c0_i32_0 = arith.constant 0 : i32
    %c0_i32_1 = arith.constant 0 : i32
    return %c0_i32, %c0_i32_0 : i32, i32
  }
  func.func @transform_3(%arg0: i32, %arg1: i32) -> (i32, i32) {
    %c0_i32 = arith.constant 0 : i32
    %c0_i32_0 = arith.constant 0 : i32
    %c0_i32_1 = arith.constant 0 : i32
    return %c0_i32, %c0_i32_0 : i32, i32
  }
  func.func @transform_4(%arg0: i32, %arg1: i32) -> (i32, i32, i32) {
    %c0_i32 = arith.constant 0 : i32
    %c0_i32_0 = arith.constant 0 : i32
    return %arg1, %arg0, %c0_i32 : i32, i32, i32
  }
  func.func @transform_5(%arg0: i32, %arg1: i32) -> (i32, i32) {
    %c0_i32 = arith.constant 0 : i32
    %c0_i32_0 = arith.constant 0 : i32
    return %arg0, %c0_i32 : i32, i32
  }
}

</mosaic_0001>

<llo_original>
// kernel: gru_minimal_forward.1
$region0: #{gru_minimal_forward.1}
  #allocation0 [shape = 'u32[]', space=smem, size = 0x4, offset = 0x4, fixed_abs, tag = 'smem constant byte address 0x4 - core index']
  #allocation1 [shape = 'u32[144,128]{1,0:T(1,128)}', space=vmem, size = 0x12000, scoped, tag = 'internal scratch']
  #allocation2 [shape = 'f32[8,128]{1,0:T(8,128)}', space=vmem, size = 0x1000, scoped, tag = 'scratch operand']
  %s0 = inlined_call_operand.vmem [shape: f32[8,8,256], index: 0, kind: input, shape index: {}]
  %s1 = inlined_call_operand.vmem [shape: f32[8,128], index: 1, kind: input, shape index: {}]
  %s2 = inlined_call_operand.vmem [shape: f32[128,128], index: 2, kind: input, shape index: {}]
  %s3 = inlined_call_operand.vmem [shape: f32[128,128], index: 3, kind: input, shape index: {}]
  %s4 = inlined_call_operand.vmem [shape: f32[8,8,128], index: 4, kind: output, shape index: {0}]
  %s5 = inlined_call_operand.vmem [shape: f32[8,128], index: 5, kind: output, shape index: {1}]
  %6 = xla_tuple %s4, %s5
  %s7 = sld [smem:[#allocation0]]
  $region38: #{gru_minimal_forward.1} parent=0
    _
  %s9 = ssub.s32 1, %s7
  %s10 = scalar_select 0, %s9, %s7
  // Predicated region
  $region2: #{gru_minimal_forward.1} parent=0 // pred_check
    _
  $region3: #{gru_minimal_forward.1} parent=0 // pred_check_branch
    %12 = sbr.rel (0) target = $region5
  $region4: #{gru_minimal_forward.1} parent=0 // pred_region
    _
  $region5: #{gru_minimal_forward.1} parent=0 // pred_fallthru
    _
  // Predicated region
  $region6: #{gru_minimal_forward.1} parent=0 // pred_check
    _
  $region7: #{gru_minimal_forward.1} parent=0 // pred_check_branch
    %14 = sbr.rel (0) target = $region9
  $region8: #{gru_minimal_forward.1} parent=0 // pred_region
    _
  $region9: #{gru_minimal_forward.1} parent=0 // pred_fallthru
    _
  // Predicated region
  $region10: #{gru_minimal_forward.1} parent=0 // pred_check
    _
  $region11: #{gru_minimal_forward.1} parent=0 // pred_check_branch
    %16 = sbr.rel (0) target = $region13
  $region12: #{gru_minimal_forward.1} parent=0 // pred_region
    _
  $region13: #{gru_minimal_forward.1} parent=0 // pred_fallthru
    _
  // Predicated region
  $region14: #{gru_minimal_forward.1} parent=0 // pred_check
    _
  $region15: #{gru_minimal_forward.1} parent=0 // pred_check_branch
    %18 = sbr.rel (0) target = $region17
  $region16: #{gru_minimal_forward.1} parent=0 // pred_region
    _
  $region17: #{gru_minimal_forward.1} parent=0 // pred_fallthru
    _
  %p19 = scmp.eq.s32.totalorder 0, 0
  // Predicated region
  $region18: #{gru_minimal_forward.1} parent=0 // pred_check
    %p20 = pneg %p19
  $region19: #{gru_minimal_forward.1} parent=0 // pred_check_branch
    %22 = sbr.rel (%p20) target = $region21
  $region20: #{gru_minimal_forward.1} parent=0 // pred_region
    %v23 = vld [vmem:[%s1] sm:$0xff]
    %24 = vst [vmem:[#allocation2] sm:$0xff] %v23
  $region21: #{gru_minimal_forward.1} parent=0 // pred_fallthru
    _
  %v25 = vld [vmem:[%s2] sm:$0xff]
  %v26 = vld [vmem:[%s2 + $0x8] sm:$0xff]
  %v27 = vld [vmem:[%s2 + $0x10] sm:$0xff]
  %v28 = vld [vmem:[%s2 + $0x18] sm:$0xff]
  %v29 = vld [vmem:[%s2 + $0x20] sm:$0xff]
  %v30 = vld [vmem:[%s2 + $0x28] sm:$0xff]
  %v31 = vld [vmem:[%s2 + $0x30] sm:$0xff]
  %v32 = vld [vmem:[%s2 + $0x38] sm:$0xff]
  %v33 = vld [vmem:[%s2 + $0x40] sm:$0xff]
  %v34 = vld [vmem:[%s2 + $0x48] sm:$0xff]
  %v35 = vld [vmem:[%s2 + $0x50] sm:$0xff]
  %v36 = vld [vmem:[%s2 + $0x58] sm:$0xff]
  %v37 = vld [vmem:[%s2 + $0x60] sm:$0xff]
  %v38 = vld [vmem:[%s2 + $0x68] sm:$0xff]
  %v39 = vld [vmem:[%s2 + $0x70] sm:$0xff]
  %v40 = vld [vmem:[%s2 + $0x78] sm:$0xff]
  %v41 = vld [vmem:[%s3] sm:$0xff]
  %v42 = vld [vmem:[%s3 + $0x8] sm:$0xff]
  %v43 = vld [vmem:[%s3 + $0x10] sm:$0xff]
  %v44 = vld [vmem:[%s3 + $0x18] sm:$0xff]
  %v45 = vld [vmem:[%s3 + $0x20] sm:$0xff]
  %v46 = vld [vmem:[%s3 + $0x28] sm:$0xff]
  %v47 = vld [vmem:[%s3 + $0x30] sm:$0xff]
  %v48 = vld [vmem:[%s3 + $0x38] sm:$0xff]
  %v49 = vld [vmem:[%s3 + $0x40] sm:$0xff]
  %v50 = vld [vmem:[%s3 + $0x48] sm:$0xff]
  %v51 = vld [vmem:[%s3 + $0x50] sm:$0xff]
  %v52 = vld [vmem:[%s3 + $0x58] sm:$0xff]
  %v53 = vld [vmem:[%s3 + $0x60] sm:$0xff]
  %v54 = vld [vmem:[%s3 + $0x68] sm:$0xff]
  %v55 = vld [vmem:[%s3 + $0x70] sm:$0xff]
  %v56 = vld [vmem:[%s3 + $0x78] sm:$0xff]
  %v57 = vld [vmem:[#allocation2] sm:$0xff]
  %v58 = vld [vmem:[%s0] sm:$0xff]
  %v59 = vld [vmem:[%s0 + $0x8] sm:$0xff]
  %60 = vmatprep.subr.mxu0 0.0
  %61 = vmatpush1.msra.mxu0 %v25
  %62 = vmatprep.subr.mxu0 0.0
  %63 = vmatpush1.msra.mxu0 %v26
  %64 = vmatprep.subr.mxu0 0.0
  %65 = vmatpush1.msra.mxu0 %v27
  %66 = vmatprep.subr.mxu0 0.0
  %67 = vmatpush1.msra.mxu0 %v28
  %68 = vmatprep.subr.mxu0 0.0
  %69 = vmatpush1.msra.mxu0 %v29
  %70 = vmatprep.subr.mxu0 0.0
  %71 = vmatpush1.msra.mxu0 %v30
  %72 = vmatprep.subr.mxu0 0.0
  %73 = vmatpush1.msra.mxu0 %v31
  %74 = vmatprep.subr.mxu0 0.0
  %75 = vmatpush1.msra.mxu0 %v32
  %76 = vmatprep.subr.mxu0 0.0
  %77 = vmatpush1.msra.mxu0 %v33
  %78 = vmatprep.subr.mxu0 0.0
  %79 = vmatpush1.msra.mxu0 %v34
  %80 = vmatprep.subr.mxu0 0.0
  %81 = vmatpush1.msra.mxu0 %v35
  %82 = vmatprep.subr.mxu0 0.0
  %83 = vmatpush1.msra.mxu0 %v36
  %84 = vmatprep.subr.mxu0 0.0
  %85 = vmatpush1.msra.mxu0 %v37
  %86 = vmatprep.subr.mxu0 0.0
  %87 = vmatpush1.msra.mxu0 %v38
  %88 = vmatprep.subr.mxu0 0.0
  %89 = vmatpush1.msra.mxu0 %v39
  %90 = vmatprep.subr.mxu0 0.0
  %91 = vmatpush1.msra.mxu0 %v40
  %92 = vmatprep.subr.mxu0 0.0
  %93 = vmatpush1.msra.mxu0 0.0
  %94 = vmatprep.subr.mxu0 0.0
  %95 = vmatpush1.msra.mxu0 0.0
  %96 = vmatprep.subr.mxu0 0.0
  %97 = vmatpush1.msra.mxu0 0.0
  %98 = vmatprep.subr.mxu0 0.0
  %99 = vmatpush1.msra.mxu0 0.0
  %100 = vmatprep.subr.mxu0 0.0
  %101 = vmatpush1.msra.mxu0 0.0
  %102 = vmatprep.subr.mxu0 0.0
  %103 = vmatpush1.msra.mxu0 0.0
  %104 = vmatprep.subr.mxu0 0.0
  %105 = vmatpush1.msra.mxu0 0.0
  %106 = vmatprep.subr.mxu0 0.0
  %107 = vmatpush1.msra.mxu0 0.0
  %108 = vmatprep.subr.mxu0 0.0
  %109 = vmatpush1.msra.mxu0 0.0
  %110 = vmatprep.subr.mxu0 0.0
  %111 = vmatpush1.msra.mxu0 0.0
  %112 = vmatprep.subr.mxu0 0.0
  %113 = vmatpush1.msra.mxu0 0.0
  %114 = vmatprep.subr.mxu0 0.0
  %115 = vmatpush1.msra.mxu0 0.0
  %116 = vmatprep.subr.mxu0 0.0
  %117 = vmatpush1.msra.mxu0 0.0
  %118 = vmatprep.subr.mxu0 0.0
  %119 = vmatpush1.msra.mxu0 0.0
  %120 = vmatprep.subr.mxu0 0.0
  %121 = vmatpush1.msra.mxu0 0.0
  %122 = vmatprep.subr.mxu0 0.0
  %123 = vmatpush1.msra.mxu0 0.0
  %124 = vmatprep.mubr.f32.mxu0 0.0
  %125 = vmatmul.mubr.f32.gmra.mrb[0].mxu0 %v57
  %v126 = vpop.f32.mrb[0].mxu0
  %v127 = vadd.f32 0.0, %v126
  %v128 = vpop.f32.mrb[0].mxu0
  %129 = vdwg.mxu0
  %v130 = vadd.f32 %v58, %v127
  %v131 = vxor.u32 %v130, 2147483648
  %v132 = vmul.f32 %v131, 1.442695
  %v133 = vpow.pop %v132
  %v134 = vadd.f32 %v133, 1.0
  %v135 = vrcp.pop %v134
  %v136 = vmul.f32 1.0, %v135
  %v137 = vmul.f32 %v57, %v136
  %138 = vmatprep.subr.mxu0 0.0
  %139 = vmatpush1.msra.mxu0 %v41
  %140 = vmatprep.subr.mxu0 0.0
  %141 = vmatpush1.msra.mxu0 %v42
  %142 = vmatprep.subr.mxu0 0.0
  %143 = vmatpush1.msra.mxu0 %v43
  %144 = vmatprep.subr.mxu0 0.0
  %145 = vmatpush1.msra.mxu0 %v44
  %146 = vmatprep.subr.mxu0 0.0
  %147 = vmatpush1.msra.mxu0 %v45
  %148 = vmatprep.subr.mxu0 0.0
  %149 = vmatpush1.msra.mxu0 %v46
  %150 = vmatprep.subr.mxu0 0.0
  %151 = vmatpush1.msra.mxu0 %v47
  %152 = vmatprep.subr.mxu0 0.0
  %153 = vmatpush1.msra.mxu0 %v48
  %154 = vmatprep.subr.mxu0 0.0
  %155 = vmatpush1.msra.mxu0 %v49
  %156 = vmatprep.subr.mxu0 0.0
  %157 = vmatpush1.msra.mxu0 %v50
  %158 = vmatprep.subr.mxu0 0.0
  %159 = vmatpush1.msra.mxu0 %v51
  %160 = vmatprep.subr.mxu0 0.0
  %161 = vmatpush1.msra.mxu0 %v52
  %162 = vmatprep.subr.mxu0 0.0
  %163 = vmatpush1.msra.mxu0 %v53
  %164 = vmatprep.subr.mxu0 0.0
  %165 = vmatpush1.msra.mxu0 %v54
  %166 = vmatprep.subr.mxu0 0.0
  %167 = vmatpush1.msra.mxu0 %v55
  %168 = vmatprep.subr.mxu0 0.0
  %169 = vmatpush1.msra.mxu0 %v56
  %170 = vmatprep.subr.mxu0 0.0
  %171 = vmatpush1.msra.mxu0 0.0
  %172 = vmatprep.subr.mxu0 0.0
  %173 = vmatpush1.msra.mxu0 0.0
  %174 = vmatprep.subr.mxu0 0.0
  %175 = vmatpush1.msra.mxu0 0.0
  %176 = vmatprep.subr.mxu0 0.0
  %177 = vmatpush1.msra.mxu0 0.0
  %178 = vmatprep.subr.mxu0 0.0
  %179 = vmatpush1.msra.mxu0 0.0
  %180 = vmatprep.subr.mxu0 0.0
  %181 = vmatpush1.msra.mxu0 0.0
  %182 = vmatprep.subr.mxu0 0.0
  %183 = vmatpush1.msra.mxu0 0.0
  %184 = vmatprep.subr.mxu0 0.0
  %185 = vmatpush1.msra.mxu0 0.0
  %186 = vmatprep.subr.mxu0 0.0
  %187 = vmatpush1.msra.mxu0 0.0
  %188 = vmatprep.subr.mxu0 0.0
  %189 = vmatpush1.msra.mxu0 0.0
  %190 = vmatprep.subr.mxu0 0.0
  %191 = vmatpush1.msra.mxu0 0.0
  %192 = vmatprep.subr.mxu0 0.0
  %193 = vmatpush1.msra.mxu0 0.0
  %194 = vmatprep.subr.mxu0 0.0
  %195 = vmatpush1.msra.mxu0 0.0
  %196 = vmatprep.subr.mxu0 0.0
  %197 = vmatpush1.msra.mxu0 0.0
  %198 = vmatprep.subr.mxu0 0.0
  %199 = vmatpush1.msra.mxu0 0.0
  %200 = vmatprep.subr.mxu0 0.0
  %201 = vmatpush1.msra.mxu0 0.0
  %202 = vmatprep.mubr.f32.mxu0 0.0
  %203 = vmatmul.mubr.f32.gmra.mrb[0].mxu0 %v137
  %v204 = vpop.f32.mrb[0].mxu0
  %v205 = vadd.f32 0.0, %v204
  %v206 = vpop.f32.mrb[0].mxu0
  %207 = vdwg.mxu0
  %v208 = vadd.f32 %v59, %v205
  %v209 = vtanh.pop %v208
  %v210 = vsub.f32 %v209, %v57
  %v211 = vmul.f32 %v136, %v210
  %v212 = vadd.f32 %v57, %v211
  %213 = vst [vmem:[%s4] sm:$0xff] %v212
  %s214 = scalar_lea.vmem %s0, 16
  %v215 = vld [vmem:[%s214] sm:$0xff]
  %v216 = vld [vmem:[%s214 + $0x8] sm:$0xff]
  %217 = vmatprep.subr.mxu0 0.0
  %218 = vmatpush1.msra.mxu0 %v25
  %219 = vmatprep.subr.mxu0 0.0
  %220 = vmatpush1.msra.mxu0 %v26
  %221 = vmatprep.subr.mxu0 0.0
  %222 = vmatpush1.msra.mxu0 %v27
  %223 = vmatprep.subr.mxu0 0.0
  %224 = vmatpush1.msra.mxu0 %v28
  %225 = vmatprep.subr.mxu0 0.0
  %226 = vmatpush1.msra.mxu0 %v29
  %227 = vmatprep.subr.mxu0 0.0
  %228 = vmatpush1.msra.mxu0 %v30
  %229 = vmatprep.subr.mxu0 0.0
  %230 = vmatpush1.msra.mxu0 %v31
  %231 = vmatprep.subr.mxu0 0.0
  %232 = vmatpush1.msra.mxu0 %v32
  %233 = vmatprep.subr.mxu0 0.0
  %234 = vmatpush1.msra.mxu0 %v33
  %235 = vmatprep.subr.mxu0 0.0
  %236 = vmatpush1.msra.mxu0 %v34
  %237 = vmatprep.subr.mxu0 0.0
  %238 = vmatpush1.msra.mxu0 %v35
  %239 = vmatprep.subr.mxu0 0.0
  %240 = vmatpush1.msra.mxu0 %v36
  %241 = vmatprep.subr.mxu0 0.0
  %242 = vmatpush1.msra.mxu0 %v37
  %243 = vmatprep.subr.mxu0 0.0
  %244 = vmatpush1.msra.mxu0 %v38
  %245 = vmatprep.subr.mxu0 0.0
  %246 = vmatpush1.msra.mxu0 %v39
  %247 = vmatprep.subr.mxu0 0.0
  %248 = vmatpush1.msra.mxu0 %v40
  %249 = vmatprep.subr.mxu0 0.0
  %250 = vmatpush1.msra.mxu0 0.0
  %251 = vmatprep.subr.mxu0 0.0
  %252 = vmatpush1.msra.mxu0 0.0
  %253 = vmatprep.subr.mxu0 0.0
  %254 = vmatpush1.msra.mxu0 0.0
  %255 = vmatprep.subr.mxu0 0.0
  %256 = vmatpush1.msra.mxu0 0.0
  %257 = vmatprep.subr.mxu0 0.0
  %258 = vmatpush1.msra.mxu0 0.0
  %259 = vmatprep.subr.mxu0 0.0
  %260 = vmatpush1.msra.mxu0 0.0
  %261 = vmatprep.subr.mxu0 0.0
  %262 = vmatpush1.msra.mxu0 0.0
  %263 = vmatprep.subr.mxu0 0.0
  %264 = vmatpush1.msra.mxu0 0.0
  %265 = vmatprep.subr.mxu0 0.0
  %266 = vmatpush1.msra.mxu0 0.0
  %267 = vmatprep.subr.mxu0 0.0
  %268 = vmatpush1.msra.mxu0 0.0
  %269 = vmatprep.subr.mxu0 0.0
  %270 = vmatpush1.msra.mxu0 0.0
  %271 = vmatprep.subr.mxu0 0.0
  %272 = vmatpush1.msra.mxu0 0.0
  %273 = vmatprep.subr.mxu0 0.0
  %274 = vmatpush1.msra.mxu0 0.0
  %275 = vmatprep.subr.mxu0 0.0
  %276 = vmatpush1.msra.mxu0 0.0
  %277 = vmatprep.subr.mxu0 0.0
  %278 = vmatpush1.msra.mxu0 0.0
  %279 = vmatprep.subr.mxu0 0.0
  %280 = vmatpush1.msra.mxu0 0.0
  %281 = vmatprep.mubr.f32.mxu0 0.0
  %282 = vmatmul.mubr.f32.gmra.mrb[0].mxu0 %v212
  %v283 = vpop.f32.mrb[0].mxu0
  %v284 = vadd.f32 0.0, %v283
  %v285 = vpop.f32.mrb[0].mxu0
  %286 = vdwg.mxu0
  %v287 = vadd.f32 %v215, %v284
  %v288 = vxor.u32 %v287, 2147483648
  %v289 = vmul.f32 %v288, 1.442695
  %v290 = vpow.pop %v289
  %v291 = vadd.f32 %v290, 1.0
  %v292 = vrcp.pop %v291
  %v293 = vmul.f32 1.0, %v292
  %v294 = vmul.f32 %v212, %v293
  %295 = vmatprep.subr.mxu0 0.0
  %296 = vmatpush1.msra.mxu0 %v41
  %297 = vmatprep.subr.mxu0 0.0
  %298 = vmatpush1.msra.mxu0 %v42
  %299 = vmatprep.subr.mxu0 0.0
  %300 = vmatpush1.msra.mxu0 %v43
  %301 = vmatprep.subr.mxu0 0.0
  %302 = vmatpush1.msra.mxu0 %v44
  %303 = vmatprep.subr.mxu0 0.0
  %304 = vmatpush1.msra.mxu0 %v45
  %305 = vmatprep.subr.mxu0 0.0
  %306 = vmatpush1.msra.mxu0 %v46
  %307 = vmatprep.subr.mxu0 0.0
  %308 = vmatpush1.msra.mxu0 %v47
  %309 = vmatprep.subr.mxu0 0.0
  %310 = vmatpush1.msra.mxu0 %v48
  %311 = vmatprep.subr.mxu0 0.0
  %312 = vmatpush1.msra.mxu0 %v49
  %313 = vmatprep.subr.mxu0 0.0
  %314 = vmatpush1.msra.mxu0 %v50
  %315 = vmatprep.subr.mxu0 0.0
  %316 = vmatpush1.msra.mxu0 %v51
  %317 = vmatprep.subr.mxu0 0.0
  %318 = vmatpush1.msra.mxu0 %v52
  %319 = vmatprep.subr.mxu0 0.0
  %320 = vmatpush1.msra.mxu0 %v53
  %321 = vmatprep.subr.mxu0 0.0
  %322 = vmatpush1.msra.mxu0 %v54
  %323 = vmatprep.subr.mxu0 0.0
  %324 = vmatpush1.msra.mxu0 %v55
  %325 = vmatprep.subr.mxu0 0.0
  %326 = vmatpush1.msra.mxu0 %v56
  %327 = vmatprep.subr.mxu0 0.0
  %328 = vmatpush1.msra.mxu0 0.0
  %329 = vmatprep.subr.mxu0 0.0
  %330 = vmatpush1.msra.mxu0 0.0
  %331 = vmatprep.subr.mxu0 0.0
  %332 = vmatpush1.msra.mxu0 0.0
  %333 = vmatprep.subr.mxu0 0.0
  %334 = vmatpush1.msra.mxu0 0.0
  %335 = vmatprep.subr.mxu0 0.0
  %336 = vmatpush1.msra.mxu0 0.0
  %337 = vmatprep.subr.mxu0 0.0
  %338 = vmatpush1.msra.mxu0 0.0
  %339 = vmatprep.subr.mxu0 0.0
  %340 = vmatpush1.msra.mxu0 0.0
  %341 = vmatprep.subr.mxu0 0.0
  %342 = vmatpush1.msra.mxu0 0.0
  %343 = vmatprep.subr.mxu0 0.0
  %344 = vmatpush1.msra.mxu0 0.0
  %345 = vmatprep.subr.mxu0 0.0
  %346 = vmatpush1.msra.mxu0 0.0
  %347 = vmatprep.subr.mxu0 0.0
  %348 = vmatpush1.msra.mxu0 0.0
  %349 = vmatprep.subr.mxu0 0.0
  %350 = vmatpush1.msra.mxu0 0.0
  %351 = vmatprep.subr.mxu0 0.0
  %352 = vmatpush1.msra.mxu0 0.0
  %353 = vmatprep.subr.mxu0 0.0
  %354 = vmatpush1.msra.mxu0 0.0
  %355 = vmatprep.subr.mxu0 0.0
  %356 = vmatpush1.msra.mxu0 0.0
  %357 = vmatprep.subr.mxu0 0.0
  %358 = vmatpush1.msra.mxu0 0.0
  %359 = vmatprep.mubr.f32.mxu0 0.0
  %360 = vmatmul.mubr.f32.gmra.mrb[0].mxu0 %v294
  %v361 = vpop.f32.mrb[0].mxu0
  %v362 = vadd.f32 0.0, %v361
  %v363 = vpop.f32.mrb[0].mxu0
  %364 = vdwg.mxu0
  %v365 = vadd.f32 %v216, %v362
  %v366 = vtanh.pop %v365
  %v367 = vsub.f32 %v366, %v212
  %v368 = vmul.f32 %v293, %v367
  %v369 = vadd.f32 %v212, %v368
  %s370 = scalar_lea.vmem %s4, 8
  %371 = vst [vmem:[%s370] sm:$0xff] %v369
  %s372 = scalar_lea.vmem %s0, 32
  %v373 = vld [vmem:[%s372] sm:$0xff]
  %v374 = vld [vmem:[%s372 + $0x8] sm:$0xff]
  %375 = vmatprep.subr.mxu0 0.0
  %376 = vmatpush1.msra.mxu0 %v25
  %377 = vmatprep.subr.mxu0 0.0
  %378 = vmatpush1.msra.mxu0 %v26
  %379 = vmatprep.subr.mxu0 0.0
  %380 = vmatpush1.msra.mxu0 %v27
  %381 = vmatprep.subr.mxu0 0.0
  %382 = vmatpush1.msra.mxu0 %v28
  %383 = vmatprep.subr.mxu0 0.0
  %384 = vmatpush1.msra.mxu0 %v29
  %385 = vmatprep.subr.mxu0 0.0
  %386 = vmatpush1.msra.mxu0 %v30
  %387 = vmatprep.subr.mxu0 0.0
  %388 = vmatpush1.msra.mxu0 %v31
  %389 = vmatprep.subr.mxu0 0.0
  %390 = vmatpush1.msra.mxu0 %v32
  %391 = vmatprep.subr.mxu0 0.0
  %392 = vmatpush1.msra.mxu0 %v33
  %393 = vmatprep.subr.mxu0 0.0
  %394 = vmatpush1.msra.mxu0 %v34
  %395 = vmatprep.subr.mxu0 0.0
  %396 = vmatpush1.msra.mxu0 %v35
  %397 = vmatprep.subr.mxu0 0.0
  %398 = vmatpush1.msra.mxu0 %v36
  %399 = vmatprep.subr.mxu0 0.0
  %400 = vmatpush1.msra.mxu0 %v37
  %401 = vmatprep.subr.mxu0 0.0
  %402 = vmatpush1.msra.mxu0 %v38
  %403 = vmatprep.subr.mxu0 0.0
  %404 = vmatpush1.msra.mxu0 %v39
  %405 = vmatprep.subr.mxu0 0.0
  %406 = vmatpush1.msra.mxu0 %v40
  %407 = vmatprep.subr.mxu0 0.0
  %408 = vmatpush1.msra.mxu0 0.0
  %409 = vmatprep.subr.mxu0 0.0
  %410 = vmatpush1.msra.mxu0 0.0
  %411 = vmatprep.subr.mxu0 0.0
  %412 = vmatpush1.msra.mxu0 0.0
  %413 = vmatprep.subr.mxu0 0.0
  %414 = vmatpush1.msra.mxu0 0.0
  %415 = vmatprep.subr.mxu0 0.0
  %416 = vmatpush1.msra.mxu0 0.0
  %417 = vmatprep.subr.mxu0 0.0
  %418 = vmatpush1.msra.mxu0 0.0
  %419 = vmatprep.subr.mxu0 0.0
  %420 = vmatpush1.msra.mxu0 0.0
  %421 = vmatprep.subr.mxu0 0.0
  %422 = vmatpush1.msra.mxu0 0.0
  %423 = vmatprep.subr.mxu0 0.0
  %424 = vmatpush1.msra.mxu0 0.0
  %425 = vmatprep.subr.mxu0 0.0
  %426 = vmatpush1.msra.mxu0 0.0
  %427 = vmatprep.subr.mxu0 0.0
  %428 = vmatpush1.msra.mxu0 0.0
  %429 = vmatprep.subr.mxu0 0.0
  %430 = vmatpush1.msra.mxu0 0.0
  %431 = vmatprep.subr.mxu0 0.0
  %432 = vmatpush1.msra.mxu0 0.0
  %433 = vmatprep.subr.mxu0 0.0
  %434 = vmatpush1.msra.mxu0 0.0
  %435 = vmatprep.subr.mxu0 0.0
  %436 = vmatpush1.msra.mxu0 0.0
  %437 = vmatprep.subr.mxu0 0.0
  %438 = vmatpush1.msra.mxu0 0.0
  %439 = vmatprep.mubr.f32.mxu0 0.0
  %440 = vmatmul.mubr.f32.gmra.mrb[0].mxu0 %v369
  %v441 = vpop.f32.mrb[0].mxu0
  %v442 = vadd.f32 0.0, %v441
  %v443 = vpop.f32.mrb[0].mxu0
  %444 = vdwg.mxu0
  %v445 = vadd.f32 %v373, %v442
  %v446 = vxor.u32 %v445, 2147483648
  %v447 = vmul.f32 %v446, 1.442695
  %v448 = vpow.pop %v447
  %v449 = vadd.f32 %v448, 1.0
  %v450 = vrcp.pop %v449
  %v451 = vmul.f32 1.0, %v450
  %v452 = vmul.f32 %v369, %v451
  %453 = vmatprep.subr.mxu0 0.0
  %454 = vmatpush1.msra.mxu0 %v41
  %455 = vmatprep.subr.mxu0 0.0
  %456 = vmatpush1.msra.mxu0 %v42
  %457 = vmatprep.subr.mxu0 0.0
  %458 = vmatpush1.msra.mxu0 %v43
  %459 = vmatprep.subr.mxu0 0.0
  %460 = vmatpush1.msra.mxu0 %v44
  %461 = vmatprep.subr.mxu0 0.0
  %462 = vmatpush1.msra.mxu0 %v45
  %463 = vmatprep.subr.mxu0 0.0
  %464 = vmatpush1.msra.mxu0 %v46
  %465 = vmatprep.subr.mxu0 0.0
  %466 = vmatpush1.msra.mxu0 %v47
  %467 = vmatprep.subr.mxu0 0.0
  %468 = vmatpush1.msra.mxu0 %v48
  %469 = vmatprep.subr.mxu0 0.0
  %470 = vmatpush1.msra.mxu0 %v49
  %471 = vmatprep.subr.mxu0 0.0
  %472 = vmatpush1.msra.mxu0 %v50
  %473 = vmatprep.subr.mxu0 0.0
  %474 = vmatpush1.msra.mxu0 %v51
  %475 = vmatprep.subr.mxu0 0.0
  %476 = vmatpush1.msra.mxu0 %v52
  %477 = vmatprep.subr.mxu0 0.0
  %478 = vmatpush1.msra.mxu0 %v53
  %479 = vmatprep.subr.mxu0 0.0
  %480 = vmatpush1.msra.mxu0 %v54
  %481 = vmatprep.subr.mxu0 0.0
  %482 = vmatpush1.msra.mxu0 %v55
  %483 = vmatprep.subr.mxu0 0.0
  %484 = vmatpush1.msra.mxu0 %v56
  %485 = vmatprep.subr.mxu0 0.0
  %486 = vmatpush1.msra.mxu0 0.0
  %487 = vmatprep.subr.mxu0 0.0
  %488 = vmatpush1.msra.mxu0 0.0
  %489 = vmatprep.subr.mxu0 0.0
  %490 = vmatpush1.msra.mxu0 0.0
  %491 = vmatprep.subr.mxu0 0.0
  %492 = vmatpush1.msra.mxu0 0.0
  %493 = vmatprep.subr.mxu0 0.0
  %494 = vmatpush1.msra.mxu0 0.0
  %495 = vmatprep.subr.mxu0 0.0
  %496 = vmatpush1.msra.mxu0 0.0
  %497 = vmatprep.subr.mxu0 0.0
  %498 = vmatpush1.msra.mxu0 0.0
  %499 = vmatprep.subr.mxu0 0.0
  %500 = vmatpush1.msra.mxu0 0.0
  %501 = vmatprep.subr.mxu0 0.0
  %502 = vmatpush1.msra.mxu0 0.0
  %503 = vmatprep.subr.mxu0 0.0
  %504 = vmatpush1.msra.mxu0 0.0
  %505 = vmatprep.subr.mxu0 0.0
  %506 = vmatpush1.msra.mxu0 0.0
  %507 = vmatprep.subr.mxu0 0.0
  %508 = vmatpush1.msra.mxu0 0.0
  %509 = vmatprep.subr.mxu0 0.0
  %510 = vmatpush1.msra.mxu0 0.0
  %511 = vmatprep.subr.mxu0 0.0
  %512 = vmatpush1.msra.mxu0 0.0
  %513 = vmatprep.subr.mxu0 0.0
  %514 = vmatpush1.msra.mxu0 0.0
  %515 = vmatprep.subr.mxu0 0.0
  %516 = vmatpush1.msra.mxu0 0.0
  %517 = vmatprep.mubr.f32.mxu0 0.0
  %518 = vmatmul.mubr.f32.gmra.mrb[0].mxu0 %v452
  %v519 = vpop.f32.mrb[0].mxu0
  %v520 = vadd.f32 0.0, %v519
  %v521 = vpop.f32.mrb[0].mxu0
  %522 = vdwg.mxu0
  %v523 = vadd.f32 %v374, %v520
  %v524 = vtanh.pop %v523
  %v525 = vsub.f32 %v524, %v369
  %v526 = vmul.f32 %v451, %v525
  %v527 = vadd.f32 %v369, %v526
  %s528 = scalar_lea.vmem %s4, 16
  %529 = vst [vmem:[%s528] sm:$0xff] %v527
  %s530 = scalar_lea.vmem %s0, 48
  %v531 = vld [vmem:[%s530] sm:$0xff]
  %v532 = vld [vmem:[%s530 + $0x8] sm:$0xff]
  %533 = vmatprep.subr.mxu0 0.0
  %534 = vmatpush1.msra.mxu0 %v25
  %535 = vmatprep.subr.mxu0 0.0
  %536 = vmatpush1.msra.mxu0 %v26
  %537 = vmatprep.subr.mxu0 0.0
  %538 = vmatpush1.msra.mxu0 %v27
  %539 = vmatprep.subr.mxu0 0.0
  %540 = vmatpush1.msra.mxu0 %v28
  %541 = vmatprep.subr.mxu0 0.0
  %542 = vmatpush1.msra.mxu0 %v29
  %543 = vmatprep.subr.mxu0 0.0
  %544 = vmatpush1.msra.mxu0 %v30
  %545 = vmatprep.subr.mxu0 0.0
  %546 = vmatpush1.msra.mxu0 %v31
  %547 = vmatprep.subr.mxu0 0.0
  %548 = vmatpush1.msra.mxu0 %v32
  %549 = vmatprep.subr.mxu0 0.0
  %550 = vmatpush1.msra.mxu0 %v33
  %551 = vmatprep.subr.mxu0 0.0
  %552 = vmatpush1.msra.mxu0 %v34
  %553 = vmatprep.subr.mxu0 0.0
  %554 = vmatpush1.msra.mxu0 %v35
  %555 = vmatprep.subr.mxu0 0.0
  %556 = vmatpush1.msra.mxu0 %v36
  %557 = vmatprep.subr.mxu0 0.0
  %558 = vmatpush1.msra.mxu0 %v37
  %559 = vmatprep.subr.mxu0 0.0
  %560 = vmatpush1.msra.mxu0 %v38
  %561 = vmatprep.subr.mxu0 0.0
  %562 = vmatpush1.msra.mxu0 %v39
  %563 = vmatprep.subr.mxu0 0.0
  %564 = vmatpush1.msra.mxu0 %v40
  %565 = vmatprep.subr.mxu0 0.0
  %566 = vmatpush1.msra.mxu0 0.0
  %567 = vmatprep.subr.mxu0 0.0
  %568 = vmatpush1.msra.mxu0 0.0
  %569 = vmatprep.subr.mxu0 0.0
  %570 = vmatpush1.msra.mxu0 0.0
  %571 = vmatprep.subr.mxu0 0.0
  %572 = vmatpush1.msra.mxu0 0.0
  %573 = vmatprep.subr.mxu0 0.0
  %574 = vmatpush1.msra.mxu0 0.0
  %575 = vmatprep.subr.mxu0 0.0
  %576 = vmatpush1.msra.mxu0 0.0
  %577 = vmatprep.subr.mxu0 0.0
  %578 = vmatpush1.msra.mxu0 0.0
  %579 = vmatprep.subr.mxu0 0.0
  %580 = vmatpush1.msra.mxu0 0.0
  %581 = vmatprep.subr.mxu0 0.0
  %582 = vmatpush1.msra.mxu0 0.0
  %583 = vmatprep.subr.mxu0 0.0
  %584 = vmatpush1.msra.mxu0 0.0
  %585 = vmatprep.subr.mxu0 0.0
  %586 = vmatpush1.msra.mxu0 0.0
  %587 = vmatprep.subr.mxu0 0.0
  %588 = vmatpush1.msra.mxu0 0.0
  %589 = vmatprep.subr.mxu0 0.0
  %590 = vmatpush1.msra.mxu0 0.0
  %591 = vmatprep.subr.mxu0 0.0
  %592 = vmatpush1.msra.mxu0 0.0
  %593 = vmatprep.subr.mxu0 0.0
  %594 = vmatpush1.msra.mxu0 0.0
  %595 = vmatprep.subr.mxu0 0.0
  %596 = vmatpush1.msra.mxu0 0.0
  %597 = vmatprep.mubr.f32.mxu0 0.0
  %598 = vmatmul.mubr.f32.gmra.mrb[0].mxu0 %v527
  %v599 = vpop.f32.mrb[0].mxu0
  %v600 = vadd.f32 0.0, %v599
  %v601 = vpop.f32.mrb[0].mxu0
  %602 = vdwg.mxu0
  %v603 = vadd.f32 %v531, %v600
  %v604 = vxor.u32 %v603, 2147483648
  %v605 = vmul.f32 %v604, 1.442695
  %v606 = vpow.pop %v605
  %v607 = vadd.f32 %v606, 1.0
  %v608 = vrcp.pop %v607
  %v609 = vmul.f32 1.0, %v608
  %v610 = vmul.f32 %v527, %v609
  %611 = vmatprep.subr.mxu0 0.0
  %612 = vmatpush1.msra.mxu0 %v41
  %613 = vmatprep.subr.mxu0 0.0
  %614 = vmatpush1.msra.mxu0 %v42
  %615 = vmatprep.subr.mxu0 0.0
  %616 = vmatpush1.msra.mxu0 %v43
  %617 = vmatprep.subr.mxu0 0.0
  %618 = vmatpush1.msra.mxu0 %v44
  %619 = vmatprep.subr.mxu0 0.0
  %620 = vmatpush1.msra.mxu0 %v45
  %621 = vmatprep.subr.mxu0 0.0
  %622 = vmatpush1.msra.mxu0 %v46
  %623 = vmatprep.subr.mxu0 0.0
  %624 = vmatpush1.msra.mxu0 %v47
  %625 = vmatprep.subr.mxu0 0.0
  %626 = vmatpush1.msra.mxu0 %v48
  %627 = vmatprep.subr.mxu0 0.0
  %628 = vmatpush1.msra.mxu0 %v49
  %629 = vmatprep.subr.mxu0 0.0
  %630 = vmatpush1.msra.mxu0 %v50
  %631 = vmatprep.subr.mxu0 0.0
  %632 = vmatpush1.msra.mxu0 %v51
  %633 = vmatprep.subr.mxu0 0.0
  %634 = vmatpush1.msra.mxu0 %v52
  %635 = vmatprep.subr.mxu0 0.0
  %636 = vmatpush1.msra.mxu0 %v53
  %637 = vmatprep.subr.mxu0 0.0
  %638 = vmatpush1.msra.mxu0 %v54
  %639 = vmatprep.subr.mxu0 0.0
  %640 = vmatpush1.msra.mxu0 %v55
  %641 = vmatprep.subr.mxu0 0.0
  %642 = vmatpush1.msra.mxu0 %v56
  %643 = vmatprep.subr.mxu0 0.0
  %644 = vmatpush1.msra.mxu0 0.0
  %645 = vmatprep.subr.mxu0 0.0
  %646 = vmatpush1.msra.mxu0 0.0
  %647 = vmatprep.subr.mxu0 0.0
  %648 = vmatpush1.msra.mxu0 0.0
  %649 = vmatprep.subr.mxu0 0.0
  %650 = vmatpush1.msra.mxu0 0.0
  %651 = vmatprep.subr.mxu0 0.0
  %652 = vmatpush1.msra.mxu0 0.0
  %653 = vmatprep.subr.mxu0 0.0
  %654 = vmatpush1.msra.mxu0 0.0
  %655 = vmatprep.subr.mxu0 0.0
  %656 = vmatpush1.msra.mxu0 0.0
  %657 = vmatprep.subr.mxu0 0.0
  %658 = vmatpush1.msra.mxu0 0.0
  %659 = vmatprep.subr.mxu0 0.0
  %660 = vmatpush1.msra.mxu0 0.0
  %661 = vmatprep.subr.mxu0 0.0
  %662 = vmatpush1.msra.mxu0 0.0
  %663 = vmatprep.subr.mxu0 0.0
  %664 = vmatpush1.msra.mxu0 0.0
  %665 = vmatprep.subr.mxu0 0.0
  %666 = vmatpush1.msra.mxu0 0.0
  %667 = vmatprep.subr.mxu0 0.0
  %668 = vmatpush1.msra.mxu0 0.0
  %669 = vmatprep.subr.mxu0 0.0
  %670 = vmatpush1.msra.mxu0 0.0
  %671 = vmatprep.subr.mxu0 0.0
  %672 = vmatpush1.msra.mxu0 0.0
  %673 = vmatprep.subr.mxu0 0.0
  %674 = vmatpush1.msra.mxu0 0.0
  %675 = vmatprep.mubr.f32.mxu0 0.0
  %676 = vmatmul.mubr.f32.gmra.mrb[0].mxu0 %v610
  %v677 = vpop.f32.mrb[0].mxu0
  %v678 = vadd.f32 0.0, %v677
  %v679 = vpop.f32.mrb[0].mxu0
  %680 = vdwg.mxu0
  %v681 = vadd.f32 %v532, %v678
  %v682 = vtanh.pop %v681
  %v683 = vsub.f32 %v682, %v527
  %v684 = vmul.f32 %v609, %v683
  %v685 = vadd.f32 %v527, %v684
  %s686 = scalar_lea.vmem %s4, 24
  %687 = vst [vmem:[%s686] sm:$0xff] %v685
  %s688 = scalar_lea.vmem %s0, 64
  %v689 = vld [vmem:[%s688] sm:$0xff]
  %v690 = vld [vmem:[%s688 + $0x8] sm:$0xff]
  %691 = vmatprep.subr.mxu0 0.0
  %692 = vmatpush1.msra.mxu0 %v25
  %693 = vmatprep.subr.mxu0 0.0
  %694 = vmatpush1.msra.mxu0 %v26
  %695 = vmatprep.subr.mxu0 0.0
  %696 = vmatpush1.msra.mxu0 %v27
  %697 = vmatprep.subr.mxu0 0.0
  %698 = vmatpush1.msra.mxu0 %v28
  %699 = vmatprep.subr.mxu0 0.0
  %700 = vmatpush1.msra.mxu0 %v29
  %701 = vmatprep.subr.mxu0 0.0
  %702 = vmatpush1.msra.mxu0 %v30
  %703 = vmatprep.subr.mxu0 0.0
  %704 = vmatpush1.msra.mxu0 %v31
  %705 = vmatprep.subr.mxu0 0.0
  %706 = vmatpush1.msra.mxu0 %v32
  %707 = vmatprep.subr.mxu0 0.0
  %708 = vmatpush1.msra.mxu0 %v33
  %709 = vmatprep.subr.mxu0 0.0
  %710 = vmatpush1.msra.mxu0 %v34
  %711 = vmatprep.subr.mxu0 0.0
  %712 = vmatpush1.msra.mxu0 %v35
  %713 = vmatprep.subr.mxu0 0.0
  %714 = vmatpush1.msra.mxu0 %v36
  %715 = vmatprep.subr.mxu0 0.0
  %716 = vmatpush1.msra.mxu0 %v37
  %717 = vmatprep.subr.mxu0 0.0
  %718 = vmatpush1.msra.mxu0 %v38
  %719 = vmatprep.subr.mxu0 0.0
  %720 = vmatpush1.msra.mxu0 %v39
  %721 = vmatprep.subr.mxu0 0.0
  %722 = vmatpush1.msra.mxu0 %v40
  %723 = vmatprep.subr.mxu0 0.0
  %724 = vmatpush1.msra.mxu0 0.0
  %725 = vmatprep.subr.mxu0 0.0
  %726 = vmatpush1.msra.mxu0 0.0
  %727 = vmatprep.subr.mxu0 0.0
  %728 = vmatpush1.msra.mxu0 0.0
  %729 = vmatprep.subr.mxu0 0.0
  %730 = vmatpush1.msra.mxu0 0.0
  %731 = vmatprep.subr.mxu0 0.0
  %732 = vmatpush1.msra.mxu0 0.0
  %733 = vmatprep.subr.mxu0 0.0
  %734 = vmatpush1.msra.mxu0 0.0
  %735 = vmatprep.subr.mxu0 0.0
  %736 = vmatpush1.msra.mxu0 0.0
  %737 = vmatprep.subr.mxu0 0.0
  %738 = vmatpush1.msra.mxu0 0.0
  %739 = vmatprep.subr.mxu0 0.0
  %740 = vmatpush1.msra.mxu0 0.0
  %741 = vmatprep.subr.mxu0 0.0
  %742 = vmatpush1.msra.mxu0 0.0
  %743 = vmatprep.subr.mxu0 0.0
  %744 = vmatpush1.msra.mxu0 0.0
  %745 = vmatprep.subr.mxu0 0.0
  %746 = vmatpush1.msra.mxu0 0.0
  %747 = vmatprep.subr.mxu0 0.0
  %748 = vmatpush1.msra.mxu0 0.0
  %749 = vmatprep.subr.mxu0 0.0
  %750 = vmatpush1.msra.mxu0 0.0
  %751 = vmatprep.subr.mxu0 0.0
  %752 = vmatpush1.msra.mxu0 0.0
  %753 = vmatprep.subr.mxu0 0.0
  %754 = vmatpush1.msra.mxu0 0.0
  %755 = vmatprep.mubr.f32.mxu0 0.0
  %756 = vmatmul.mubr.f32.gmra.mrb[0].mxu0 %v685
  %v757 = vpop.f32.mrb[0].mxu0
  %v758 = vadd.f32 0.0, %v757
  %v759 = vpop.f32.mrb[0].mxu0
  %760 = vdwg.mxu0
  %v761 = vadd.f32 %v689, %v758
  %v762 = vxor.u32 %v761, 2147483648
  %v763 = vmul.f32 %v762, 1.442695
  %v764 = vpow.pop %v763
  %v765 = vadd.f32 %v764, 1.0
  %v766 = vrcp.pop %v765
  %v767 = vmul.f32 1.0, %v766
  %v768 = vmul.f32 %v685, %v767
  %769 = vmatprep.subr.mxu0 0.0
  %770 = vmatpush1.msra.mxu0 %v41
  %771 = vmatprep.subr.mxu0 0.0
  %772 = vmatpush1.msra.mxu0 %v42
  %773 = vmatprep.subr.mxu0 0.0
  %774 = vmatpush1.msra.mxu0 %v43
  %775 = vmatprep.subr.mxu0 0.0
  %776 = vmatpush1.msra.mxu0 %v44
  %777 = vmatprep.subr.mxu0 0.0
  %778 = vmatpush1.msra.mxu0 %v45
  %779 = vmatprep.subr.mxu0 0.0
  %780 = vmatpush1.msra.mxu0 %v46
  %781 = vmatprep.subr.mxu0 0.0
  %782 = vmatpush1.msra.mxu0 %v47
  %783 = vmatprep.subr.mxu0 0.0
  %784 = vmatpush1.msra.mxu0 %v48
  %785 = vmatprep.subr.mxu0 0.0
  %786 = vmatpush1.msra.mxu0 %v49
  %787 = vmatprep.subr.mxu0 0.0
  %788 = vmatpush1.msra.mxu0 %v50
  %789 = vmatprep.subr.mxu0 0.0
  %790 = vmatpush1.msra.mxu0 %v51
  %791 = vmatprep.subr.mxu0 0.0
  %792 = vmatpush1.msra.mxu0 %v52
  %793 = vmatprep.subr.mxu0 0.0
  %794 = vmatpush1.msra.mxu0 %v53
  %795 = vmatprep.subr.mxu0 0.0
  %796 = vmatpush1.msra.mxu0 %v54
  %797 = vmatprep.subr.mxu0 0.0
  %798 = vmatpush1.msra.mxu0 %v55
  %799 = vmatprep.subr.mxu0 0.0
  %800 = vmatpush1.msra.mxu0 %v56
  %801 = vmatprep.subr.mxu0 0.0
  %802 = vmatpush1.msra.mxu0 0.0
  %803 = vmatprep.subr.mxu0 0.0
  %804 = vmatpush1.msra.mxu0 0.0
  %805 = vmatprep.subr.mxu0 0.0
  %806 = vmatpush1.msra.mxu0 0.0
  %807 = vmatprep.subr.mxu0 0.0
  %808 = vmatpush1.msra.mxu0 0.0
  %809 = vmatprep.subr.mxu0 0.0
  %810 = vmatpush1.msra.mxu0 0.0
  %811 = vmatprep.subr.mxu0 0.0
  %812 = vmatpush1.msra.mxu0 0.0
  %813 = vmatprep.subr.mxu0 0.0
  %814 = vmatpush1.msra.mxu0 0.0
  %815 = vmatprep.subr.mxu0 0.0
  %816 = vmatpush1.msra.mxu0 0.0
  %817 = vmatprep.subr.mxu0 0.0
  %818 = vmatpush1.msra.mxu0 0.0
  %819 = vmatprep.subr.mxu0 0.0
  %820 = vmatpush1.msra.mxu0 0.0
  %821 = vmatprep.subr.mxu0 0.0
  %822 = vmatpush1.msra.mxu0 0.0
  %823 = vmatprep.subr.mxu0 0.0
  %824 = vmatpush1.msra.mxu0 0.0
  %825 = vmatprep.subr.mxu0 0.0
  %826 = vmatpush1.msra.mxu0 0.0
  %827 = vmatprep.subr.mxu0 0.0
  %828 = vmatpush1.msra.mxu0 0.0
  %829 = vmatprep.subr.mxu0 0.0
  %830 = vmatpush1.msra.mxu0 0.0
  %831 = vmatprep.subr.mxu0 0.0
  %832 = vmatpush1.msra.mxu0 0.0
  %833 = vmatprep.mubr.f32.mxu0 0.0
  %834 = vmatmul.mubr.f32.gmra.mrb[0].mxu0 %v768
  %v835 = vpop.f32.mrb[0].mxu0
  %v836 = vadd.f32 0.0, %v835
  %v837 = vpop.f32.mrb[0].mxu0
  %838 = vdwg.mxu0
  %v839 = vadd.f32 %v690, %v836
  %v840 = vtanh.pop %v839
  %v841 = vsub.f32 %v840, %v685
  %v842 = vmul.f32 %v767, %v841
  %v843 = vadd.f32 %v685, %v842
  %s844 = scalar_lea.vmem %s4, 32
  %845 = vst [vmem:[%s844] sm:$0xff] %v843
  %s846 = scalar_lea.vmem %s0, 80
  %v847 = vld [vmem:[%s846] sm:$0xff]
  %v848 = vld [vmem:[%s846 + $0x8] sm:$0xff]
  %849 = vmatprep.subr.mxu0 0.0
  %850 = vmatpush1.msra.mxu0 %v25
  %851 = vmatprep.subr.mxu0 0.0
  %852 = vmatpush1.msra.mxu0 %v26
  %853 = vmatprep.subr.mxu0 0.0
  %854 = vmatpush1.msra.mxu0 %v27
  %855 = vmatprep.subr.mxu0 0.0
  %856 = vmatpush1.msra.mxu0 %v28
  %857 = vmatprep.subr.mxu0 0.0
  %858 = vmatpush1.msra.mxu0 %v29
  %859 = vmatprep.subr.mxu0 0.0
  %860 = vmatpush1.msra.mxu0 %v30
  %861 = vmatprep.subr.mxu0 0.0
  %862 = vmatpush1.msra.mxu0 %v31
  %863 = vmatprep.subr.mxu0 0.0
  %864 = vmatpush1.msra.mxu0 %v32
  %865 = vmatprep.subr.mxu0 0.0
  %866 = vmatpush1.msra.mxu0 %v33
  %867 = vmatprep.subr.mxu0 0.0
  %868 = vmatpush1.msra.mxu0 %v34
  %869 = vmatprep.subr.mxu0 0.0
  %870 = vmatpush1.msra.mxu0 %v35
  %871 = vmatprep.subr.mxu0 0.0
  %872 = vmatpush1.msra.mxu0 %v36
  %873 = vmatprep.subr.mxu0 0.0
  %874 = vmatpush1.msra.mxu0 %v37
  %875 = vmatprep.subr.mxu0 0.0
  %876 = vmatpush1.msra.mxu0 %v38
  %877 = vmatprep.subr.mxu0 0.0
  %878 = vmatpush1.msra.mxu0 %v39
  %879 = vmatprep.subr.mxu0 0.0
  %880 = vmatpush1.msra.mxu0 %v40
  %881 = vmatprep.subr.mxu0 0.0
  %882 = vmatpush1.msra.mxu0 0.0
  %883 = vmatprep.subr.mxu0 0.0
  %884 = vmatpush1.msra.mxu0 0.0
  %885 = vmatprep.subr.mxu0 0.0
  %886 = vmatpush1.msra.mxu0 0.0
  %887 = vmatprep.subr.mxu0 0.0
  %888 = vmatpush1.msra.mxu0 0.0
  %889 = vmatprep.subr.mxu0 0.0
  %890 = vmatpush1.msra.mxu0 0.0
  %891 = vmatprep.subr.mxu0 0.0
  %892 = vmatpush1.msra.mxu0 0.0
  %893 = vmatprep.subr.mxu0 0.0
  %894 = vmatpush1.msra.mxu0 0.0
  %895 = vmatprep.subr.mxu0 0.0
  %896 = vmatpush1.msra.mxu0 0.0
  %897 = vmatprep.subr.mxu0 0.0
  %898 = vmatpush1.msra.mxu0 0.0
  %899 = vmatprep.subr.mxu0 0.0
  %900 = vmatpush1.msra.mxu0 0.0
  %901 = vmatprep.subr.mxu0 0.0
  %902 = vmatpush1.msra.mxu0 0.0
  %903 = vmatprep.subr.mxu0 0.0
  %904 = vmatpush1.msra.mxu0 0.0
  %905 = vmatprep.subr.mxu0 0.0
  %906 = vmatpush1.msra.mxu0 0.0
  %907 = vmatprep.subr.mxu0 0.0
  %908 = vmatpush1.msra.mxu0 0.0
  %909 = vmatprep.subr.mxu0 0.0
  %910 = vmatpush1.msra.mxu0 0.0
  %911 = vmatprep.subr.mxu0 0.0
  %912 = vmatpush1.msra.mxu0 0.0
  %913 = vmatprep.mubr.f32.mxu0 0.0
  %914 = vmatmul.mubr.f32.gmra.mrb[0].mxu0 %v843
  %v915 = vpop.f32.mrb[0].mxu0
  %v916 = vadd.f32 0.0, %v915
  %v917 = vpop.f32.mrb[0].mxu0
  %918 = vdwg.mxu0
  %v919 = vadd.f32 %v847, %v916
  %v920 = vxor.u32 %v919, 2147483648
  %v921 = vmul.f32 %v920, 1.442695
  %v922 = vpow.pop %v921
  %v923 = vadd.f32 %v922, 1.0
  %v924 = vrcp.pop %v923
  %v925 = vmul.f32 1.0, %v924
  %v926 = vmul.f32 %v843, %v925
  %927 = vmatprep.subr.mxu0 0.0
  %928 = vmatpush1.msra.mxu0 %v41
  %929 = vmatprep.subr.mxu0 0.0
  %930 = vmatpush1.msra.mxu0 %v42
  %931 = vmatprep.subr.mxu0 0.0
  %932 = vmatpush1.msra.mxu0 %v43
  %933 = vmatprep.subr.mxu0 0.0
  %934 = vmatpush1.msra.mxu0 %v44
  %935 = vmatprep.subr.mxu0 0.0
  %936 = vmatpush1.msra.mxu0 %v45
  %937 = vmatprep.subr.mxu0 0.0
  %938 = vmatpush1.msra.mxu0 %v46
  %939 = vmatprep.subr.mxu0 0.0
  %940 = vmatpush1.msra.mxu0 %v47
  %941 = vmatprep.subr.mxu0 0.0
  %942 = vmatpush1.msra.mxu0 %v48
  %943 = vmatprep.subr.mxu0 0.0
  %944 = vmatpush1.msra.mxu0 %v49
  %945 = vmatprep.subr.mxu0 0.0
  %946 = vmatpush1.msra.mxu0 %v50
  %947 = vmatprep.subr.mxu0 0.0
  %948 = vmatpush1.msra.mxu0 %v51
  %949 = vmatprep.subr.mxu0 0.0
  %950 = vmatpush1.msra.mxu0 %v52
  %951 = vmatprep.subr.mxu0 0.0
  %952 = vmatpush1.msra.mxu0 %v53
  %953 = vmatprep.subr.mxu0 0.0
  %954 = vmatpush1.msra.mxu0 %v54
  %955 = vmatprep.subr.mxu0 0.0
  %956 = vmatpush1.msra.mxu0 %v55
  %957 = vmatprep.subr.mxu0 0.0
  %958 = vmatpush1.msra.mxu0 %v56
  %959 = vmatprep.subr.mxu0 0.0
  %960 = vmatpush1.msra.mxu0 0.0
  %961 = vmatprep.subr.mxu0 0.0
  %962 = vmatpush1.msra.mxu0 0.0
  %963 = vmatprep.subr.mxu0 0.0
  %964 = vmatpush1.msra.mxu0 0.0
  %965 = vmatprep.subr.mxu0 0.0
  %966 = vmatpush1.msra.mxu0 0.0
  %967 = vmatprep.subr.mxu0 0.0
  %968 = vmatpush1.msra.mxu0 0.0
  %969 = vmatprep.subr.mxu0 0.0
  %970 = vmatpush1.msra.mxu0 0.0
  %971 = vmatprep.subr.mxu0 0.0
  %972 = vmatpush1.msra.mxu0 0.0
  %973 = vmatprep.subr.mxu0 0.0
  %974 = vmatpush1.msra.mxu0 0.0
  %975 = vmatprep.subr.mxu0 0.0
  %976 = vmatpush1.msra.mxu0 0.0
  %977 = vmatprep.subr.mxu0 0.0
  %978 = vmatpush1.msra.mxu0 0.0
  %979 = vmatprep.subr.mxu0 0.0
  %980 = vmatpush1.msra.mxu0 0.0
  %981 = vmatprep.subr.mxu0 0.0
  %982 = vmatpush1.msra.mxu0 0.0
  %983 = vmatprep.subr.mxu0 0.0
  %984 = vmatpush1.msra.mxu0 0.0
  %985 = vmatprep.subr.mxu0 0.0
  %986 = vmatpush1.msra.mxu0 0.0
  %987 = vmatprep.subr.mxu0 0.0
  %988 = vmatpush1.msra.mxu0 0.0
  %989 = vmatprep.subr.mxu0 0.0
  %990 = vmatpush1.msra.mxu0 0.0
  %991 = vmatprep.mubr.f32.mxu0 0.0
  %992 = vmatmul.mubr.f32.gmra.mrb[0].mxu0 %v926
  %v993 = vpop.f32.mrb[0].mxu0
  %v994 = vadd.f32 0.0, %v993
  %v995 = vpop.f32.mrb[0].mxu0
  %996 = vdwg.mxu0
  %v997 = vadd.f32 %v848, %v994
  %v998 = vtanh.pop %v997
  %v999 = vsub.f32 %v998, %v843
  %v1000 = vmul.f32 %v925, %v999
  %v1001 = vadd.f32 %v843, %v1000
  %s1002 = scalar_lea.vmem %s4, 40
  %1003 = vst [vmem:[%s1002] sm:$0xff] %v1001
  %s1004 = scalar_lea.vmem %s0, 96
  %v1005 = vld [vmem:[%s1004] sm:$0xff]
  %v1006 = vld [vmem:[%s1004 + $0x8] sm:$0xff]
  %1007 = vmatprep.subr.mxu0 0.0
  %1008 = vmatpush1.msra.mxu0 %v25
  %1009 = vmatprep.subr.mxu0 0.0
  %1010 = vmatpush1.msra.mxu0 %v26
  %1011 = vmatprep.subr.mxu0 0.0
  %1012 = vmatpush1.msra.mxu0 %v27
  %1013 = vmatprep.subr.mxu0 0.0
  %1014 = vmatpush1.msra.mxu0 %v28
  %1015 = vmatprep.subr.mxu0 0.0
  %1016 = vmatpush1.msra.mxu0 %v29
  %1017 = vmatprep.subr.mxu0 0.0
  %1018 = vmatpush1.msra.mxu0 %v30
  %1019 = vmatprep.subr.mxu0 0.0
  %1020 = vmatpush1.msra.mxu0 %v31
  %1021 = vmatprep.subr.mxu0 0.0
  %1022 = vmatpush1.msra.mxu0 %v32
  %1023 = vmatprep.subr.mxu0 0.0
  %1024 = vmatpush1.msra.mxu0 %v33
  %1025 = vmatprep.subr.mxu0 0.0
  %1026 = vmatpush1.msra.mxu0 %v34
  %1027 = vmatprep.subr.mxu0 0.0
  %1028 = vmatpush1.msra.mxu0 %v35
  %1029 = vmatprep.subr.mxu0 0.0
  %1030 = vmatpush1.msra.mxu0 %v36
  %1031 = vmatprep.subr.mxu0 0.0
  %1032 = vmatpush1.msra.mxu0 %v37
  %1033 = vmatprep.subr.mxu0 0.0
  %1034 = vmatpush1.msra.mxu0 %v38
  %1035 = vmatprep.subr.mxu0 0.0
  %1036 = vmatpush1.msra.mxu0 %v39
  %1037 = vmatprep.subr.mxu0 0.0
  %1038 = vmatpush1.msra.mxu0 %v40
  %1039 = vmatprep.subr.mxu0 0.0
  %1040 = vmatpush1.msra.mxu0 0.0
  %1041 = vmatprep.subr.mxu0 0.0
  %1042 = vmatpush1.msra.mxu0 0.0
  %1043 = vmatprep.subr.mxu0 0.0
  %1044 = vmatpush1.msra.mxu0 0.0
  %1045 = vmatprep.subr.mxu0 0.0
  %1046 = vmatpush1.msra.mxu0 0.0
  %1047 = vmatprep.subr.mxu0 0.0
  %1048 = vmatpush1.msra.mxu0 0.0
  %1049 = vmatprep.subr.mxu0 0.0
  %1050 = vmatpush1.msra.mxu0 0.0
  %1051 = vmatprep.subr.mxu0 0.0
  %1052 = vmatpush1.msra.mxu0 0.0
  %1053 = vmatprep.subr.mxu0 0.0
  %1054 = vmatpush1.msra.mxu0 0.0
  %1055 = vmatprep.subr.mxu0 0.0
  %1056 = vmatpush1.msra.mxu0 0.0
  %1057 = vmatprep.subr.mxu0 0.0
  %1058 = vmatpush1.msra.mxu0 0.0
  %1059 = vmatprep.subr.mxu0 0.0
  %1060 = vmatpush1.msra.mxu0 0.0
  %1061 = vmatprep.subr.mxu0 0.0
  %1062 = vmatpush1.msra.mxu0 0.0
  %1063 = vmatprep.subr.mxu0 0.0
  %1064 = vmatpush1.msra.mxu0 0.0
  %1065 = vmatprep.subr.mxu0 0.0
  %1066 = vmatpush1.msra.mxu0 0.0
  %1067 = vmatprep.subr.mxu0 0.0
  %1068 = vmatpush1.msra.mxu0 0.0
  %1069 = vmatprep.subr.mxu0 0.0
  %1070 = vmatpush1.msra.mxu0 0.0
  %1071 = vmatprep.mubr.f32.mxu0 0.0
  %1072 = vmatmul.mubr.f32.gmra.mrb[0].mxu0 %v1001
  %v1073 = vpop.f32.mrb[0].mxu0
  %v1074 = vadd.f32 0.0, %v1073
  %v1075 = vpop.f32.mrb[0].mxu0
  %1076 = vdwg.mxu0
  %v1077 = vadd.f32 %v1005, %v1074
  %v1078 = vxor.u32 %v1077, 2147483648
  %v1079 = vmul.f32 %v1078, 1.442695
  %v1080 = vpow.pop %v1079
  %v1081 = vadd.f32 %v1080, 1.0
  %v1082 = vrcp.pop %v1081
  %v1083 = vmul.f32 1.0, %v1082
  %v1084 = vmul.f32 %v1001, %v1083
  %1085 = vmatprep.subr.mxu0 0.0
  %1086 = vmatpush1.msra.mxu0 %v41
  %1087 = vmatprep.subr.mxu0 0.0
  %1088 = vmatpush1.msra.mxu0 %v42
  %1089 = vmatprep.subr.mxu0 0.0
  %1090 = vmatpush1.msra.mxu0 %v43
  %1091 = vmatprep.subr.mxu0 0.0
  %1092 = vmatpush1.msra.mxu0 %v44
  %1093 = vmatprep.subr.mxu0 0.0
  %1094 = vmatpush1.msra.mxu0 %v45
  %1095 = vmatprep.subr.mxu0 0.0
  %1096 = vmatpush1.msra.mxu0 %v46
  %1097 = vmatprep.subr.mxu0 0.0
  %1098 = vmatpush1.msra.mxu0 %v47
  %1099 = vmatprep.subr.mxu0 0.0
  %1100 = vmatpush1.msra.mxu0 %v48
  %1101 = vmatprep.subr.mxu0 0.0
  %1102 = vmatpush1.msra.mxu0 %v49
  %1103 = vmatprep.subr.mxu0 0.0
  %1104 = vmatpush1.msra.mxu0 %v50
  %1105 = vmatprep.subr.mxu0 0.0
  %1106 = vmatpush1.msra.mxu0 %v51
  %1107 = vmatprep.subr.mxu0 0.0
  %1108 = vmatpush1.msra.mxu0 %v52
  %1109 = vmatprep.subr.mxu0 0.0
  %1110 = vmatpush1.msra.mxu0 %v53
  %1111 = vmatprep.subr.mxu0 0.0
  %1112 = vmatpush1.msra.mxu0 %v54
  %1113 = vmatprep.subr.mxu0 0.0
  %1114 = vmatpush1.msra.mxu0 %v55
  %1115 = vmatprep.subr.mxu0 0.0
  %1116 = vmatpush1.msra.mxu0 %v56
  %1117 = vmatprep.subr.mxu0 0.0
  %1118 = vmatpush1.msra.mxu0 0.0
  %1119 = vmatprep.subr.mxu0 0.0
  %1120 = vmatpush1.msra.mxu0 0.0
  %1121 = vmatprep.subr.mxu0 0.0
  %1122 = vmatpush1.msra.mxu0 0.0
  %1123 = vmatprep.subr.mxu0 0.0
  %1124 = vmatpush1.msra.mxu0 0.0
  %1125 = vmatprep.subr.mxu0 0.0
  %1126 = vmatpush1.msra.mxu0 0.0
  %1127 = vmatprep.subr.mxu0 0.0
  %1128 = vmatpush1.msra.mxu0 0.0
  %1129 = vmatprep.subr.mxu0 0.0
  %1130 = vmatpush1.msra.mxu0 0.0
  %1131 = vmatprep.subr.mxu0 0.0
  %1132 = vmatpush1.msra.mxu0 0.0
  %1133 = vmatprep.subr.mxu0 0.0
  %1134 = vmatpush1.msra.mxu0 0.0
  %1135 = vmatprep.subr.mxu0 0.0
  %1136 = vmatpush1.msra.mxu0 0.0
  %1137 = vmatprep.subr.mxu0 0.0
  %1138 = vmatpush1.msra.mxu0 0.0
  %1139 = vmatprep.subr.mxu0 0.0
  %1140 = vmatpush1.msra.mxu0 0.0
  %1141 = vmatprep.subr.mxu0 0.0
  %1142 = vmatpush1.msra.mxu0 0.0
  %1143 = vmatprep.subr.mxu0 0.0
  %1144 = vmatpush1.msra.mxu0 0.0
  %1145 = vmatprep.subr.mxu0 0.0
  %1146 = vmatpush1.msra.mxu0 0.0
  %1147 = vmatprep.subr.mxu0 0.0
  %1148 = vmatpush1.msra.mxu0 0.0
  %1149 = vmatprep.mubr.f32.mxu0 0.0
  %1150 = vmatmul.mubr.f32.gmra.mrb[0].mxu0 %v1084
  %v1151 = vpop.f32.mrb[0].mxu0
  %v1152 = vadd.f32 0.0, %v1151
  %v1153 = vpop.f32.mrb[0].mxu0
  %1154 = vdwg.mxu0
  %v1155 = vadd.f32 %v1006, %v1152
  %v1156 = vtanh.pop %v1155
  %v1157 = vsub.f32 %v1156, %v1001
  %v1158 = vmul.f32 %v1083, %v1157
  %v1159 = vadd.f32 %v1001, %v1158
  %s1160 = scalar_lea.vmem %s4, 48
  %1161 = vst [vmem:[%s1160] sm:$0xff] %v1159
  %s1162 = scalar_lea.vmem %s0, 112
  %v1163 = vld [vmem:[%s1162] sm:$0xff]
  %v1164 = vld [vmem:[%s1162 + $0x8] sm:$0xff]
  %1165 = vmatprep.subr.mxu0 0.0
  %1166 = vmatpush1.msra.mxu0 %v25
  %1167 = vmatprep.subr.mxu0 0.0
  %1168 = vmatpush1.msra.mxu0 %v26
  %1169 = vmatprep.subr.mxu0 0.0
  %1170 = vmatpush1.msra.mxu0 %v27
  %1171 = vmatprep.subr.mxu0 0.0
  %1172 = vmatpush1.msra.mxu0 %v28
  %1173 = vmatprep.subr.mxu0 0.0
  %1174 = vmatpush1.msra.mxu0 %v29
  %1175 = vmatprep.subr.mxu0 0.0
  %1176 = vmatpush1.msra.mxu0 %v30
  %1177 = vmatprep.subr.mxu0 0.0
  %1178 = vmatpush1.msra.mxu0 %v31
  %1179 = vmatprep.subr.mxu0 0.0
  %1180 = vmatpush1.msra.mxu0 %v32
  %1181 = vmatprep.subr.mxu0 0.0
  %1182 = vmatpush1.msra.mxu0 %v33
  %1183 = vmatprep.subr.mxu0 0.0
  %1184 = vmatpush1.msra.mxu0 %v34
  %1185 = vmatprep.subr.mxu0 0.0
  %1186 = vmatpush1.msra.mxu0 %v35
  %1187 = vmatprep.subr.mxu0 0.0
  %1188 = vmatpush1.msra.mxu0 %v36
  %1189 = vmatprep.subr.mxu0 0.0
  %1190 = vmatpush1.msra.mxu0 %v37
  %1191 = vmatprep.subr.mxu0 0.0
  %1192 = vmatpush1.msra.mxu0 %v38
  %1193 = vmatprep.subr.mxu0 0.0
  %1194 = vmatpush1.msra.mxu0 %v39
  %1195 = vmatprep.subr.mxu0 0.0
  %1196 = vmatpush1.msra.mxu0 %v40
  %1197 = vmatprep.subr.mxu0 0.0
  %1198 = vmatpush1.msra.mxu0 0.0
  %1199 = vmatprep.subr.mxu0 0.0
  %1200 = vmatpush1.msra.mxu0 0.0
  %1201 = vmatprep.subr.mxu0 0.0
  %1202 = vmatpush1.msra.mxu0 0.0
  %1203 = vmatprep.subr.mxu0 0.0
  %1204 = vmatpush1.msra.mxu0 0.0
  %1205 = vmatprep.subr.mxu0 0.0
  %1206 = vmatpush1.msra.mxu0 0.0
  %1207 = vmatprep.subr.mxu0 0.0
  %1208 = vmatpush1.msra.mxu0 0.0
  %1209 = vmatprep.subr.mxu0 0.0
  %1210 = vmatpush1.msra.mxu0 0.0
  %1211 = vmatprep.subr.mxu0 0.0
  %1212 = vmatpush1.msra.mxu0 0.0
  %1213 = vmatprep.subr.mxu0 0.0
  %1214 = vmatpush1.msra.mxu0 0.0
  %1215 = vmatprep.subr.mxu0 0.0
  %1216 = vmatpush1.msra.mxu0 0.0
  %1217 = vmatprep.subr.mxu0 0.0
  %1218 = vmatpush1.msra.mxu0 0.0
  %1219 = vmatprep.subr.mxu0 0.0
  %1220 = vmatpush1.msra.mxu0 0.0
  %1221 = vmatprep.subr.mxu0 0.0
  %1222 = vmatpush1.msra.mxu0 0.0
  %1223 = vmatprep.subr.mxu0 0.0
  %1224 = vmatpush1.msra.mxu0 0.0
  %1225 = vmatprep.subr.mxu0 0.0
  %1226 = vmatpush1.msra.mxu0 0.0
  %1227 = vmatprep.subr.mxu0 0.0
  %1228 = vmatpush1.msra.mxu0 0.0
  %1229 = vmatprep.mubr.f32.mxu0 0.0
  %1230 = vmatmul.mubr.f32.gmra.mrb[0].mxu0 %v1159
  %v1231 = vpop.f32.mrb[0].mxu0
  %v1232 = vadd.f32 0.0, %v1231
  %v1233 = vpop.f32.mrb[0].mxu0
  %1234 = vdwg.mxu0
  %v1235 = vadd.f32 %v1163, %v1232
  %v1236 = vxor.u32 %v1235, 2147483648
  %v1237 = vmul.f32 %v1236, 1.442695
  %v1238 = vpow.pop %v1237
  %v1239 = vadd.f32 %v1238, 1.0
  %v1240 = vrcp.pop %v1239
  %v1241 = vmul.f32 1.0, %v1240
  %v1242 = vmul.f32 %v1159, %v1241
  %1243 = vmatprep.subr.mxu0 0.0
  %1244 = vmatpush1.msra.mxu0 %v41
  %1245 = vmatprep.subr.mxu0 0.0
  %1246 = vmatpush1.msra.mxu0 %v42
  %1247 = vmatprep.subr.mxu0 0.0
  %1248 = vmatpush1.msra.mxu0 %v43
  %1249 = vmatprep.subr.mxu0 0.0
  %1250 = vmatpush1.msra.mxu0 %v44
  %1251 = vmatprep.subr.mxu0 0.0
  %1252 = vmatpush1.msra.mxu0 %v45
  %1253 = vmatprep.subr.mxu0 0.0
  %1254 = vmatpush1.msra.mxu0 %v46
  %1255 = vmatprep.subr.mxu0 0.0
  %1256 = vmatpush1.msra.mxu0 %v47
  %1257 = vmatprep.subr.mxu0 0.0
  %1258 = vmatpush1.msra.mxu0 %v48
  %1259 = vmatprep.subr.mxu0 0.0
  %1260 = vmatpush1.msra.mxu0 %v49
  %1261 = vmatprep.subr.mxu0 0.0
  %1262 = vmatpush1.msra.mxu0 %v50
  %1263 = vmatprep.subr.mxu0 0.0
  %1264 = vmatpush1.msra.mxu0 %v51
  %1265 = vmatprep.subr.mxu0 0.0
  %1266 = vmatpush1.msra.mxu0 %v52
  %1267 = vmatprep.subr.mxu0 0.0
  %1268 = vmatpush1.msra.mxu0 %v53
  %1269 = vmatprep.subr.mxu0 0.0
  %1270 = vmatpush1.msra.mxu0 %v54
  %1271 = vmatprep.subr.mxu0 0.0
  %1272 = vmatpush1.msra.mxu0 %v55
  %1273 = vmatprep.subr.mxu0 0.0
  %1274 = vmatpush1.msra.mxu0 %v56
  %1275 = vmatprep.subr.mxu0 0.0
  %1276 = vmatpush1.msra.mxu0 0.0
  %1277 = vmatprep.subr.mxu0 0.0
  %1278 = vmatpush1.msra.mxu0 0.0
  %1279 = vmatprep.subr.mxu0 0.0
  %1280 = vmatpush1.msra.mxu0 0.0
  %1281 = vmatprep.subr.mxu0 0.0
  %1282 = vmatpush1.msra.mxu0 0.0
  %1283 = vmatprep.subr.mxu0 0.0
  %1284 = vmatpush1.msra.mxu0 0.0
  %1285 = vmatprep.subr.mxu0 0.0
  %1286 = vmatpush1.msra.mxu0 0.0
  %1287 = vmatprep.subr.mxu0 0.0
  %1288 = vmatpush1.msra.mxu0 0.0
  %1289 = vmatprep.subr.mxu0 0.0
  %1290 = vmatpush1.msra.mxu0 0.0
  %1291 = vmatprep.subr.mxu0 0.0
  %1292 = vmatpush1.msra.mxu0 0.0
  %1293 = vmatprep.subr.mxu0 0.0
  %1294 = vmatpush1.msra.mxu0 0.0
  %1295 = vmatprep.subr.mxu0 0.0
  %1296 = vmatpush1.msra.mxu0 0.0
  %1297 = vmatprep.subr.mxu0 0.0
  %1298 = vmatpush1.msra.mxu0 0.0
  %1299 = vmatprep.subr.mxu0 0.0
  %1300 = vmatpush1.msra.mxu0 0.0
  %1301 = vmatprep.subr.mxu0 0.0
  %1302 = vmatpush1.msra.mxu0 0.0
  %1303 = vmatprep.subr.mxu0 0.0
  %1304 = vmatpush1.msra.mxu0 0.0
  %1305 = vmatprep.subr.mxu0 0.0
  %1306 = vmatpush1.msra.mxu0 0.0
  %1307 = vmatprep.mubr.f32.mxu0 0.0
  %1308 = vmatmul.mubr.f32.gmra.mrb[0].mxu0 %v1242
  %v1309 = vpop.f32.mrb[0].mxu0
  %v1310 = vadd.f32 0.0, %v1309
  %v1311 = vpop.f32.mrb[0].mxu0
  %1312 = vdwg.mxu0
  %v1313 = vadd.f32 %v1164, %v1310
  %v1314 = vtanh.pop %v1313
  %v1315 = vsub.f32 %v1314, %v1159
  %v1316 = vmul.f32 %v1241, %v1315
  %v1317 = vadd.f32 %v1159, %v1316
  %s1318 = scalar_lea.vmem %s4, 56
  %1319 = vst [vmem:[%s1318] sm:$0xff] %v1317
  %1320 = vst [vmem:[#allocation2] sm:$0xff] %v1317
  %1321 = vst [vmem:[%s5] sm:$0xff] %v1317
  // Predicated region
  $region22: #{gru_minimal_forward.1} parent=0 // pred_check
    _
  $region23: #{gru_minimal_forward.1} parent=0 // pred_check_branch
    %1323 = sbr.rel (0) target = $region25
  $region24: #{gru_minimal_forward.1} parent=0 // pred_region
    _
  $region25: #{gru_minimal_forward.1} parent=0 // pred_fallthru
    _
  // Predicated region
  $region26: #{gru_minimal_forward.1} parent=0 // pred_check
    _
  $region27: #{gru_minimal_forward.1} parent=0 // pred_check_branch
    %1325 = sbr.rel (0) target = $region29
  $region28: #{gru_minimal_forward.1} parent=0 // pred_region
    _
  $region29: #{gru_minimal_forward.1} parent=0 // pred_fallthru
    _
  // Predicated region
  $region30: #{gru_minimal_forward.1} parent=0 // pred_check
    _
  $region31: #{gru_minimal_forward.1} parent=0 // pred_check_branch
    %1327 = sbr.rel (0) target = $region33
  $region32: #{gru_minimal_forward.1} parent=0 // pred_region
    _
  $region33: #{gru_minimal_forward.1} parent=0 // pred_fallthru
    _
  // Predicated region
  $region34: #{gru_minimal_forward.1} parent=0 // pred_check
    _
  $region35: #{gru_minimal_forward.1} parent=0 // pred_check_branch
    %1329 = sbr.rel (0) target = $region37
  $region36: #{gru_minimal_forward.1} parent=0 // pred_region
    _
  $region37: #{gru_minimal_forward.1} parent=0 // pred_fallthru
    _

</llo_original>
